<compile_context>
chip_gen: v7x
topology: tpu7x:2x2x1
jax: 0.10.0
libtpu: 0.0.40
codegen_flags: <defaults>
</compile_context>

<pallas_src>
import functools

import jax
import jax.numpy as jnp
from jax.experimental import pallas as pl
from jax.experimental.pallas import tpu as pltpu


def _round_up(v, m):
    return (v + m - 1) // m * m


def _dcrn_reason_kernel(x_ref, xt_ref, batch_ref, q0_ref, r0_ref,
                        wq_ref, wr0_ref, whh_ref, b_ref,
                        q_out_ref, r_out_ref, *, steps, layers, dpad):
    Dp = dpad
    X = x_ref[...]                                  # [Np, Dp] f32
    XT = xt_ref[...]                                # [Dp, Np] f32
    seg = batch_ref[...]                            # [1, Np]  i32 (-1 = padding)
    Bp = q0_ref.shape[0]
    Np = X.shape[0]

    # ---- segment membership mask, built once (no dense one-hot input) ----
    row_ids = jax.lax.broadcasted_iota(jnp.int32, (Bp, Np), 0)
    M = seg == row_ids                              # [Bp, Np] bool

    # ---- hoist loop-invariant weight loads / bias broadcasts ----
    Wq = [wq_ref[l] for l in range(layers)]         # [Dp, 4*Dp] each
    Whh = [whh_ref[l] for l in range(layers)]       # [Dp, 4*Dp] each
    Wr0 = wr0_ref[...]                              # [Dp, 4*Dp]
    Bias = [jnp.broadcast_to(b_ref[l], (Bp, 4 * Dp)) for l in range(layers)]

    def step_body(_, carry):
        q, r, hs, cs = carry
        hs = list(hs)
        cs = list(cs)
        # ---- multi-layer LSTM, sequence length 1 ----
        for l in range(layers):
            if l == 0:
                pre = (jnp.dot(q, Wq[0], preferred_element_type=jnp.float32)
                       + jnp.dot(r, Wr0, preferred_element_type=jnp.float32))
            else:
                pre = jnp.dot(hs[l - 1], Wq[l],
                              preferred_element_type=jnp.float32)
            gates = (pre
                     + jnp.dot(hs[l], Whh[l],
                               preferred_element_type=jnp.float32)
                     + Bias[l])                     # [Bp, 4*Dp]
            # gate slices are 128-aligned whole-tile reads (gate-major layout)
            i_g = jax.nn.sigmoid(gates[:, 0 * Dp:1 * Dp])
            f_g = jax.nn.sigmoid(gates[:, 1 * Dp:2 * Dp])
            g_g = jnp.tanh(gates[:, 2 * Dp:3 * Dp])
            o_g = jax.nn.sigmoid(gates[:, 3 * Dp:4 * Dp])
            cs[l] = f_g * cs[l] + i_g * g_g
            hs[l] = o_g * jnp.tanh(cs[l])
        q_new = hs[layers - 1]                      # [Bp, Dp]

        # ---- e[b, n] = <q[b], x[n]>  (pre-transposed X -> plain matmul) ----
        E = jnp.dot(q_new, XT, preferred_element_type=jnp.float32)  # [Bp, Np]

        # ---- segment softmax over the nodes of each graph ----
        neg = jnp.float32(-1e30)
        masked = jnp.where(M, E, neg)
        seg_max = jnp.max(masked, axis=1, keepdims=True)            # [Bp, 1]
        exp_bn = jnp.where(M, jnp.exp(masked - seg_max), 0.0)       # [Bp, Np]
        seg_sum = jnp.maximum(jnp.sum(exp_bn, axis=1, keepdims=True),
                              jnp.float32(1e-30))   # guard empty/padded rows
        a_bn = exp_bn / seg_sum                                     # [Bp, Np]

        # ---- r = scatter_add(a * x, batch)  ==  a_bn @ X ----
        r_new = jnp.dot(a_bn, X, preferred_element_type=jnp.float32)  # [Bp, Dp]
        return q_new, r_new, tuple(hs), tuple(cs)

    init_h = tuple(jnp.zeros((Bp, Dp), jnp.float32) for _ in range(layers))
    init_c = tuple(jnp.zeros((Bp, Dp), jnp.float32) for _ in range(layers))
    q_f, r_f, _, _ = jax.lax.fori_loop(
        0, steps, step_body, (q0_ref[...], r0_ref[...], init_h, init_c))

    # lane-dense whole-tile stores; concat back to [B, 2D] happens in wrapper
    q_out_ref[...] = q_f.astype(q_out_ref.dtype)
    r_out_ref[...] = r_f.astype(r_out_ref.dtype)


def init_lstm_params(key, hidden, layers):
    """Deterministic PyTorch-style LSTM init (uniform(-1/sqrt(D), 1/sqrt(D))),
    repacked into a lane-aligned, gate-major padded layout.

    Returns:
      wq   : [L, Dp, 4*Dp]  layer 0: q-half of W_ih; layers>0: W_ih (input h[l-1])
      wr0  : [Dp, 4*Dp]     layer 0: r-half of W_ih
      whh  : [L, Dp, 4*Dp]
      bias : [L, 1, 4*Dp]   b_ih + b_hh
    Gate g (PyTorch order i, f, g, o) occupies output columns [g*Dp, g*Dp + D).
    All padded rows/columns are zero, which keeps padded lanes of h/c exactly 0.
    """
    D = hidden
    Dp = _round_up(D, 128)
    k = 1.0 / (float(D) ** 0.5)
    wq_l, whh_l, b_l = [], [], []
    wr0 = jnp.zeros((Dp, 4 * Dp), jnp.float32)
    for l in range(layers):
        in_sz = 2 * D if l == 0 else D
        key, k1, k2, k3, k4 = jax.random.split(key, 5)
        w_ih = jax.random.uniform(k1, (4 * D, in_sz), jnp.float32, -k, k)
        w_hh = jax.random.uniform(k2, (4 * D, D), jnp.float32, -k, k)
        b_ih = jax.random.uniform(k3, (4 * D,), jnp.float32, -k, k)
        b_hh = jax.random.uniform(k4, (4 * D,), jnp.float32, -k, k)
        wq = jnp.zeros((Dp, 4 * Dp), jnp.float32)
        whh = jnp.zeros((Dp, 4 * Dp), jnp.float32)
        bias = jnp.zeros((1, 4 * Dp), jnp.float32)
        for g in range(4):
            blk_ih = w_ih[g * D:(g + 1) * D, :]     # [D, in_sz]
            blk_hh = w_hh[g * D:(g + 1) * D, :]     # [D, D]
            wq = wq.at[:D, g * Dp:g * Dp + D].set(blk_ih[:, :D].T)
            if l == 0:
                wr0 = wr0.at[:D, g * Dp:g * Dp + D].set(blk_ih[:, D:2 * D].T)
            whh = whh.at[:D, g * Dp:g * Dp + D].set(blk_hh.T)
            bias = bias.at[0, g * Dp:g * Dp + D].set(
                b_ih[g * D:(g + 1) * D] + b_hh[g * D:(g + 1) * D])
        wq_l.append(wq)
        whh_l.append(whh)
        b_l.append(bias)
    return jnp.stack(wq_l), wr0, jnp.stack(whh_l), jnp.stack(b_l)


def dcrn_reason(x, batch, qstar, params, *, steps, layers):
    """x: [N, D] node features, batch: [N] int32 segment ids, qstar: [B, 2D]."""
    if steps <= 0:
        return qstar
    N, D = x.shape
    B = qstar.shape[0]
    Dp = _round_up(D, 128)
    Bp = _round_up(B, 8)
    Np = _round_up(N, 128)

    # Pad everything to whole (8,128) tiles; padded batch ids are -1 so they
    # never enter any segment's softmax.
    x_pad = jnp.zeros((Np, Dp), jnp.float32).at[:N, :D].set(
        x.astype(jnp.float32))
    xt_pad = x_pad.T                                               # [Dp, Np]
    batch_pad = jnp.full((1, Np), -1, jnp.int32).at[0, :N].set(
        batch.astype(jnp.int32))
    q0 = jnp.zeros((Bp, Dp), jnp.float32).at[:B, :D].set(
        qstar[:, :D].astype(jnp.float32))
    r0 = jnp.zeros((Bp, Dp), jnp.float32).at[:B, :D].set(
        qstar[:, D:].astype(jnp.float32))

    wq, wr0, whh, bias = params

    kern = functools.partial(
        _dcrn_reason_kernel, steps=steps, layers=layers, dpad=Dp)
    vmem = pl.BlockSpec(memory_space=pltpu.MemorySpace.VMEM)
    q_out, r_out = pl.pallas_call(
        kern,
        out_shape=(jax.ShapeDtypeStruct((Bp, Dp), qstar.dtype),
                   jax.ShapeDtypeStruct((Bp, Dp), qstar.dtype)),
        in_specs=[vmem] * 9,
        out_specs=(vmem, vmem),
    )(x_pad, xt_pad, batch_pad, q0, r0, wq, wr0, whh, bias)

    # Un-pad and re-assemble qstar = [q, r] (cheap XLA glue outside the kernel).
    return jnp.concatenate([q_out[:B, :D], r_out[:B, :D]], axis=-1)


if __name__ == "__main__":
    input_size = 16       # D (module input_size / LSTM hidden size)
    steps = 3
    layers = 2
    N = 20                # total number of nodes across graphs

    key = jax.random.PRNGKey(0)
    kx, kq, kp = jax.random.split(key, 3)

    x = jax.random.normal(kx, (N, input_size), jnp.float32)
    # 3 graphs with 7, 6, 7 nodes respectively
    batch = jnp.array([0] * 7 + [1] * 6 + [2] * 7, dtype=jnp.int32)
    batch_size = int(jnp.max(batch)) + 1
    qstar0 = jax.random.normal(kq, (batch_size, 2 * input_size), jnp.float32)

    params = init_lstm_params(kp, input_size, layers)

    out = dcrn_reason(x, batch, qstar0, params, steps=steps, layers=layers)
    out = jax.block_until_ready(out)
    assert out.shape == (batch_size, 2 * input_size)
    assert bool(jnp.all(jnp.isfinite(out)))
    print("KERNEL_OK")
</pallas_src>

<mosaic_0001>
module attributes {stable_mosaic.version = 11 : i64} {
  func.func @_dcrn_reason_kernel(%arg0: memref<128x128xf32, #tpu.memory_space<vmem>>, %arg1: memref<128x128xf32, #tpu.memory_space<vmem>>, %arg2: memref<1x128xi32, #tpu.memory_space<vmem>>, %arg3: memref<8x128xf32, #tpu.memory_space<vmem>>, %arg4: memref<8x128xf32, #tpu.memory_space<vmem>>, %arg5: memref<2x128x512xf32, #tpu.memory_space<vmem>>, %arg6: memref<128x512xf32, #tpu.memory_space<vmem>>, %arg7: memref<2x128x512xf32, #tpu.memory_space<vmem>>, %arg8: memref<2x1x512xf32, #tpu.memory_space<vmem>>, %arg9: memref<8x128xf32, #tpu.memory_space<vmem>>, %arg10: memref<8x128xf32, #tpu.memory_space<vmem>>) attributes {dimension_semantics = [], scalar_prefetch = 0 : i64, scratch_operands = 0 : i64, tpu.core_type = #tpu.core_type<tc>} {
    %c0 = arith.constant 0 : index
    %c0_0 = arith.constant 0 : index
    %0 = vector.load %arg0[%c0, %c0_0] : memref<128x128xf32, #tpu.memory_space<vmem>>, vector<128x128xf32>
    %c0_1 = arith.constant 0 : index
    %c0_2 = arith.constant 0 : index
    %1 = vector.load %arg1[%c0_1, %c0_2] : memref<128x128xf32, #tpu.memory_space<vmem>>, vector<128x128xf32>
    %c0_3 = arith.constant 0 : index
    %c0_4 = arith.constant 0 : index
    %2 = vector.load %arg2[%c0_3, %c0_4] : memref<1x128xi32, #tpu.memory_space<vmem>>, vector<1x128xi32>
    %3 = tpu.iota {dimensions = array<i32: 0>} : vector<8x128xi32>
    %4 = vector.broadcast %2 : vector<1x128xi32> to vector<8x128xi32>
    %5 = arith.cmpi eq, %4, %3 : vector<8x128xi32>
    %c0_5 = arith.constant 0 : index
    %c0_6 = arith.constant 0 : index
    %c0_7 = arith.constant 0 : index
    %6 = vector.load %arg5[%c0_5, %c0_6, %c0_7] : memref<2x128x512xf32, #tpu.memory_space<vmem>>, vector<1x128x512xf32>
    %7 = vector.shape_cast %6 : vector<1x128x512xf32> to vector<128x512xf32>
    %c1 = arith.constant 1 : index
    %c0_8 = arith.constant 0 : index
    %c0_9 = arith.constant 0 : index
    %8 = vector.load %arg5[%c1, %c0_8, %c0_9] : memref<2x128x512xf32, #tpu.memory_space<vmem>>, vector<1x128x512xf32>
    %9 = vector.shape_cast %8 : vector<1x128x512xf32> to vector<128x512xf32>
    %c0_10 = arith.constant 0 : index
    %c0_11 = arith.constant 0 : index
    %c0_12 = arith.constant 0 : index
    %10 = vector.load %arg7[%c0_10, %c0_11, %c0_12] : memref<2x128x512xf32, #tpu.memory_space<vmem>>, vector<1x128x512xf32>
    %11 = vector.shape_cast %10 : vector<1x128x512xf32> to vector<128x512xf32>
    %c1_13 = arith.constant 1 : index
    %c0_14 = arith.constant 0 : index
    %c0_15 = arith.constant 0 : index
    %12 = vector.load %arg7[%c1_13, %c0_14, %c0_15] : memref<2x128x512xf32, #tpu.memory_space<vmem>>, vector<1x128x512xf32>
    %13 = vector.shape_cast %12 : vector<1x128x512xf32> to vector<128x512xf32>
    %c0_16 = arith.constant 0 : index
    %c0_17 = arith.constant 0 : index
    %14 = vector.load %arg6[%c0_16, %c0_17] : memref<128x512xf32, #tpu.memory_space<vmem>>, vector<128x512xf32>
    %c0_18 = arith.constant 0 : index
    %c0_19 = arith.constant 0 : index
    %c0_20 = arith.constant 0 : index
    %15 = vector.load %arg8[%c0_18, %c0_19, %c0_20] : memref<2x1x512xf32, #tpu.memory_space<vmem>>, vector<1x1x512xf32>
    %16 = vector.shape_cast %15 : vector<1x1x512xf32> to vector<1x512xf32>
    %17 = vector.shape_cast %16 : vector<1x512xf32> to vector<1x512xf32>
    %18 = vector.broadcast %17 : vector<1x512xf32> to vector<8x512xf32>
    %c1_21 = arith.constant 1 : index
    %c0_22 = arith.constant 0 : index
    %c0_23 = arith.constant 0 : index
    %19 = vector.load %arg8[%c1_21, %c0_22, %c0_23] : memref<2x1x512xf32, #tpu.memory_space<vmem>>, vector<1x1x512xf32>
    %20 = vector.shape_cast %19 : vector<1x1x512xf32> to vector<1x512xf32>
    %21 = vector.shape_cast %20 : vector<1x512xf32> to vector<1x512xf32>
    %22 = vector.broadcast %21 : vector<1x512xf32> to vector<8x512xf32>
    %cst = arith.constant 0.000000e+00 : f32
    %23 = vector.broadcast %cst : f32 to vector<8x128xf32>
    %cst_24 = arith.constant 0.000000e+00 : f32
    %24 = vector.broadcast %cst_24 : f32 to vector<8x128xf32>
    %cst_25 = arith.constant 0.000000e+00 : f32
    %25 = vector.broadcast %cst_25 : f32 to vector<8x128xf32>
    %cst_26 = arith.constant 0.000000e+00 : f32
    %26 = vector.broadcast %cst_26 : f32 to vector<8x128xf32>
    %c0_27 = arith.constant 0 : index
    %c0_28 = arith.constant 0 : index
    %27 = vector.load %arg3[%c0_27, %c0_28] : memref<8x128xf32, #tpu.memory_space<vmem>>, vector<8x128xf32>
    %c0_29 = arith.constant 0 : index
    %c0_30 = arith.constant 0 : index
    %28 = vector.load %arg4[%c0_29, %c0_30] : memref<8x128xf32, #tpu.memory_space<vmem>>, vector<8x128xf32>
    %c0_i32 = arith.constant 0 : i32
    %c3_i32 = arith.constant 3 : i32
    %29 = arith.addi %c0_i32, %c3_i32 : i32
    %c1_i32 = arith.constant 1 : i32
    %30:6 = scf.for %arg11 = %c0_i32 to %29 step %c1_i32 iter_args(%arg12 = %27, %arg13 = %28, %arg14 = %23, %arg15 = %24, %arg16 = %25, %arg17 = %26) -> (vector<8x128xf32>, vector<8x128xf32>, vector<8x128xf32>, vector<8x128xf32>, vector<8x128xf32>, vector<8x128xf32>)  : i32 {
      %cst_35 = arith.constant dense<0.000000e+00> : vector<8x512xf32>
      %33 = tpu.matmul %arg12, %7, %cst_35 {dimension_numbers = #tpu.dot_dimension_numbers<[1], [0], [0], [1], [0, 0, 1, 1], [], []>} : vector<8x128xf32>, vector<128x512xf32>, vector<8x512xf32> -> vector<8x512xf32>
      %cst_36 = arith.constant dense<0.000000e+00> : vector<8x512xf32>
      %34 = tpu.matmul %arg13, %14, %cst_36 {dimension_numbers = #tpu.dot_dimension_numbers<[1], [0], [0], [1], [0, 0, 1, 1], [], []>} : vector<8x128xf32>, vector<128x512xf32>, vector<8x512xf32> -> vector<8x512xf32>
      %35 = arith.addf %33, %34 : vector<8x512xf32>
      %cst_37 = arith.constant dense<0.000000e+00> : vector<8x512xf32>
      %36 = tpu.matmul %arg14, %11, %cst_37 {dimension_numbers = #tpu.dot_dimension_numbers<[1], [0], [0], [1], [0, 0, 1, 1], [], []>} : vector<8x128xf32>, vector<128x512xf32>, vector<8x512xf32> -> vector<8x512xf32>
      %37 = arith.addf %35, %36 : vector<8x512xf32>
      %38 = arith.addf %37, %18 : vector<8x512xf32>
      %39 = vector.extract_strided_slice %38 {offsets = [0, 0], sizes = [8, 128], strides = [1, 1]} : vector<8x512xf32> to vector<8x128xf32>
      %40 = arith.negf %39 : vector<8x128xf32>
      %41 = math.exp %40 : vector<8x128xf32>
      %cst_38 = arith.constant 1.000000e+00 : f32
      %42 = vector.broadcast %cst_38 : f32 to vector<8x128xf32>
      %43 = arith.addf %42, %41 : vector<8x128xf32>
      %44 = arith.divf %42, %43 : vector<8x128xf32>
      %45 = vector.extract_strided_slice %38 {offsets = [0, 128], sizes = [8, 128], strides = [1, 1]} : vector<8x512xf32> to vector<8x128xf32>
      %46 = arith.negf %45 : vector<8x128xf32>
      %47 = math.exp %46 : vector<8x128xf32>
      %cst_39 = arith.constant 1.000000e+00 : f32
      %48 = vector.broadcast %cst_39 : f32 to vector<8x128xf32>
      %49 = arith.addf %48, %47 : vector<8x128xf32>
      %50 = arith.divf %48, %49 : vector<8x128xf32>
      %51 = vector.extract_strided_slice %38 {offsets = [0, 256], sizes = [8, 128], strides = [1, 1]} : vector<8x512xf32> to vector<8x128xf32>
      %52 = math.tanh %51 : vector<8x128xf32>
      %53 = vector.extract_strided_slice %38 {offsets = [0, 384], sizes = [8, 128], strides = [1, 1]} : vector<8x512xf32> to vector<8x128xf32>
      %54 = arith.negf %53 : vector<8x128xf32>
      %55 = math.exp %54 : vector<8x128xf32>
      %cst_40 = arith.constant 1.000000e+00 : f32
      %56 = vector.broadcast %cst_40 : f32 to vector<8x128xf32>
      %57 = arith.addf %56, %55 : vector<8x128xf32>
      %58 = arith.divf %56, %57 : vector<8x128xf32>
      %59 = arith.mulf %50, %arg16 : vector<8x128xf32>
      %60 = arith.mulf %44, %52 : vector<8x128xf32>
      %61 = arith.addf %59, %60 : vector<8x128xf32>
      %62 = math.tanh %61 : vector<8x128xf32>
      %63 = arith.mulf %58, %62 : vector<8x128xf32>
      %cst_41 = arith.constant dense<0.000000e+00> : vector<8x512xf32>
      %64 = tpu.matmul %63, %9, %cst_41 {dimension_numbers = #tpu.dot_dimension_numbers<[1], [0], [0], [1], [0, 0, 1, 1], [], []>} : vector<8x128xf32>, vector<128x512xf32>, vector<8x512xf32> -> vector<8x512xf32>
      %cst_42 = arith.constant dense<0.000000e+00> : vector<8x512xf32>
      %65 = tpu.matmul %arg15, %13, %cst_42 {dimension_numbers = #tpu.dot_dimension_numbers<[1], [0], [0], [1], [0, 0, 1, 1], [], []>} : vector<8x128xf32>, vector<128x512xf32>, vector<8x512xf32> -> vector<8x512xf32>
      %66 = arith.addf %64, %65 : vector<8x512xf32>
      %67 = arith.addf %66, %22 : vector<8x512xf32>
      %68 = vector.extract_strided_slice %67 {offsets = [0, 0], sizes = [8, 128], strides = [1, 1]} : vector<8x512xf32> to vector<8x128xf32>
      %69 = arith.negf %68 : vector<8x128xf32>
      %70 = math.exp %69 : vector<8x128xf32>
      %cst_43 = arith.constant 1.000000e+00 : f32
      %71 = vector.broadcast %cst_43 : f32 to vector<8x128xf32>
      %72 = arith.addf %71, %70 : vector<8x128xf32>
      %73 = arith.divf %71, %72 : vector<8x128xf32>
      %74 = vector.extract_strided_slice %67 {offsets = [0, 128], sizes = [8, 128], strides = [1, 1]} : vector<8x512xf32> to vector<8x128xf32>
      %75 = arith.negf %74 : vector<8x128xf32>
      %76 = math.exp %75 : vector<8x128xf32>
      %cst_44 = arith.constant 1.000000e+00 : f32
      %77 = vector.broadcast %cst_44 : f32 to vector<8x128xf32>
      %78 = arith.addf %77, %76 : vector<8x128xf32>
      %79 = arith.divf %77, %78 : vector<8x128xf32>
      %80 = vector.extract_strided_slice %67 {offsets = [0, 256], sizes = [8, 128], strides = [1, 1]} : vector<8x512xf32> to vector<8x128xf32>
      %81 = math.tanh %80 : vector<8x128xf32>
      %82 = vector.extract_strided_slice %67 {offsets = [0, 384], sizes = [8, 128], strides = [1, 1]} : vector<8x512xf32> to vector<8x128xf32>
      %83 = arith.negf %82 : vector<8x128xf32>
      %84 = math.exp %83 : vector<8x128xf32>
      %cst_45 = arith.constant 1.000000e+00 : f32
      %85 = vector.broadcast %cst_45 : f32 to vector<8x128xf32>
      %86 = arith.addf %85, %84 : vector<8x128xf32>
      %87 = arith.divf %85, %86 : vector<8x128xf32>
      %88 = arith.mulf %79, %arg17 : vector<8x128xf32>
      %89 = arith.mulf %73, %81 : vector<8x128xf32>
      %90 = arith.addf %88, %89 : vector<8x128xf32>
      %91 = math.tanh %90 : vector<8x128xf32>
      %92 = arith.mulf %87, %91 : vector<8x128xf32>
      %cst_46 = arith.constant dense<0.000000e+00> : vector<8x128xf32>
      %93 = tpu.matmul %92, %1, %cst_46 {dimension_numbers = #tpu.dot_dimension_numbers<[1], [0], [0], [1], [0, 0, 1, 1], [], []>} : vector<8x128xf32>, vector<128x128xf32>, vector<8x128xf32> -> vector<8x128xf32>
      %cst_47 = arith.constant -1.000000e+30 : f32
      %94 = vector.broadcast %cst_47 : f32 to vector<8x128xf32>
      %95 = arith.select %5, %93, %94 : vector<8x128xi1>, vector<8x128xf32>
      %cst_48 = arith.constant dense<0xFF800000> : vector<8xf32>
      %96 = vector.multi_reduction <maximumf>, %95, %cst_48 [1] : vector<8x128xf32> to vector<8xf32>
      %97 = vector.shape_cast %96 : vector<8xf32> to vector<8x1xf32>
      %98 = vector.broadcast %97 : vector<8x1xf32> to vector<8x128xf32>
      %99 = arith.subf %95, %98 : vector<8x128xf32>
      %100 = math.exp %99 : vector<8x128xf32>
      %cst_49 = arith.constant 0.000000e+00 : f32
      %101 = vector.broadcast %cst_49 : f32 to vector<8x128xf32>
      %102 = arith.select %5, %100, %101 : vector<8x128xi1>, vector<8x128xf32>
      %cst_50 = arith.constant dense<0.000000e+00> : vector<8xf32>
      %103 = vector.multi_reduction <add>, %102, %cst_50 [1] : vector<8x128xf32> to vector<8xf32>
      %104 = vector.shape_cast %103 : vector<8xf32> to vector<8x1xf32>
      %cst_51 = arith.constant 1.000000e-30 : f32
      %105 = vector.broadcast %cst_51 : f32 to vector<8x1xf32>
      %106 = arith.maximumf %104, %105 : vector<8x1xf32>
      %107 = vector.broadcast %106 : vector<8x1xf32> to vector<8x128xf32>
      %108 = arith.divf %102, %107 : vector<8x128xf32>
      %cst_52 = arith.constant dense<0.000000e+00> : vector<8x128xf32>
      %109 = tpu.matmul %108, %0, %cst_52 {dimension_numbers = #tpu.dot_dimension_numbers<[1], [0], [0], [1], [0, 0, 1, 1], [], []>} : vector<8x128xf32>, vector<128x128xf32>, vector<8x128xf32> -> vector<8x128xf32>
      scf.yield %92, %109, %63, %92, %61, %90 : vector<8x128xf32>, vector<8x128xf32>, vector<8x128xf32>, vector<8x128xf32>, vector<8x128xf32>, vector<8x128xf32>
    }
    %c0_31 = arith.constant 0 : index
    %c0_32 = arith.constant 0 : index
    %31 = vector.load %arg9[%c0_31, %c0_32] : memref<8x128xf32, #tpu.memory_space<vmem>>, vector<8x128xf32>
    tpu.vector_store %arg9[%c0_31, %c0_32], %30#0 {strides = array<i32>} : memref<8x128xf32, #tpu.memory_space<vmem>>, vector<8x128xf32>,
    %c0_33 = arith.constant 0 : index
    %c0_34 = arith.constant 0 : index
    %32 = vector.load %arg10[%c0_33, %c0_34] : memref<8x128xf32, #tpu.memory_space<vmem>>, vector<8x128xf32>
    tpu.vector_store %arg10[%c0_33, %c0_34], %30#1 {strides = array<i32>} : memref<8x128xf32, #tpu.memory_space<vmem>>, vector<8x128xf32>,
    return
  }
}

</mosaic_0001>

<llo_original>
// kernel: tpu_custom_call.1
$region0: #{tpu_custom_call.1}
  #allocation0 [shape = 'u32[]', space=smem, size = 0x4, offset = 0x4, fixed_abs, tag = 'smem constant byte address 0x4 - core index']
  #allocation1 [shape = 'u32[144,128]{1,0:T(1,128)}', space=vmem, size = 0x12000, scoped, tag = 'internal scratch']
  %s0 = inlined_call_operand.hbm [shape: f32[128,128], index: 0, kind: input, shape index: {}]
  %s1 = inlined_call_operand.hbm [shape: f32[128,128], index: 1, kind: input, shape index: {}]
  %s2 = inlined_call_operand.vmem [shape: s32[1,128], index: 2, kind: input, shape index: {}]
  %s3 = inlined_call_operand.vmem [shape: f32[8,128], index: 3, kind: input, shape index: {}]
  %s4 = inlined_call_operand.hbm [shape: f32[8,128], index: 4, kind: input, shape index: {}]
  %s5 = inlined_call_operand.hbm [shape: f32[2,128,512], index: 5, kind: input, shape index: {}]
  %s6 = inlined_call_operand.hbm [shape: f32[128,512], index: 6, kind: input, shape index: {}]
  %s7 = inlined_call_operand.hbm [shape: f32[2,128,512], index: 7, kind: input, shape index: {}]
  %s8 = inlined_call_operand.vmem [shape: f32[2,1,512], index: 8, kind: input, shape index: {}]
  %s9 = inlined_call_operand.hbm [shape: f32[8,128], index: 9, kind: output, shape index: {0}]
  %s10 = inlined_call_operand.hbm [shape: f32[8,128], index: 10, kind: output, shape index: {1}]
  %11 = xla_tuple %s9, %s10
  %s12 = sld [smem:[#allocation0]]
  $region85: #{tpu_custom_call.1} parent=0
    _
  %s14 = ssub.s32 1, %s12
  %s15 = scalar_select 0, %s14, %s12
  $region1: #{tpu_custom_call.1} parent=0
    #allocation2 [shape = 'u8[65536]{0}', space=vmem, size = 0x10000, scoped, tag = 'input window, operand 0, single buffered']
    #allocation3 [shape = 's32[1]{0}', space=sflag, size = 0x4, scoped, tag = 'scoped memory for tpu_custom_call.1']
    #allocation4 [shape = 's32[1]{0}', space=sflag, size = 0x4, scoped, tag = 'scoped memory for tpu_custom_call.1']
    #allocation5 [shape = 'u8[65536]{0}', space=vmem, size = 0x10000, scoped, tag = 'input window, operand 1, single buffered']
    #allocation6 [shape = 's32[1]{0}', space=sflag, size = 0x4, scoped, tag = 'scoped memory for tpu_custom_call.1']
    #allocation7 [shape = 'u8[4096]{0}', space=vmem, size = 0x1000, scoped, tag = 'input window, operand 4, single buffered']
    #allocation8 [shape = 'u8[524288]{0}', space=vmem, size = 0x80000, scoped, tag = 'input window, operand 5, single buffered']
    #allocation9 [shape = 's32[1]{0}', space=sflag, size = 0x4, scoped, tag = 'scoped memory for tpu_custom_call.1']
    #allocation10 [shape = 'u8[262144]{0}', space=vmem, size = 0x40000, scoped, tag = 'input window, operand 6, single buffered']
    #allocation11 [shape = 'u8[524288]{0}', space=vmem, size = 0x80000, scoped, tag = 'input window, operand 7, single buffered']
    #allocation12 [shape = 's32[1]{0}', space=sflag, size = 0x4, scoped, tag = 'scoped memory for tpu_custom_call.1']
    #allocation13 [shape = 'u8[4096]{0}', space=vmem, size = 0x1000, scoped, tag = 'output window, operand 0, single buffered']
    #allocation14 [shape = 'u8[4096]{0}', space=vmem, size = 0x1000, scoped, tag = 'output window, operand 1, single buffered']
    #allocation15 [shape = 's32[1]{0}', space=sflag, size = 0x4, scoped, tag = 'scoped memory for tpu_custom_call.1']
    %16 = vsyncpa [#allocation3], 0
    %17 = vsyncpa [#allocation6], 0
    %18 = vsyncpa [#allocation9], 0
    %19 = vsyncpa [#allocation12], 0
    %20 = vsyncpa [#allocation4], 0
    %21 = vsyncpa [#allocation15], 0
    // Predicated region
    $region2: #{tpu_custom_call.1} parent=1 // pred_check
      _
    $region3: #{tpu_custom_call.1} parent=1 // pred_check_branch
      %23 = sbr.rel (0) target = $region5
    $region4: #{tpu_custom_call.1} parent=1 // pred_region
      %s25 = ssub.s32 2048, 2048
      %26 = vsyncadd [#allocation3], %s25
      %s27 = sshll.u32 [#allocation2], 4
      %s28 = int_to_ptr.vmem [resolvable:$true] %s27
      %33 = dma.hbm_to_vmem [thread:$0]  %s0, 2048, %s28, [#allocation3], 128, 128, 8
    $region5: #{tpu_custom_call.1} parent=1 // pred_fallthru
      _
    // Predicated region
    $region6: #{tpu_custom_call.1} parent=1 // pred_check
      _
    $region7: #{tpu_custom_call.1} parent=1 // pred_check_branch
      %35 = sbr.rel (0) target = $region9
    $region8: #{tpu_custom_call.1} parent=1 // pred_region
      %s37 = ssub.s32 2048, 2048
      %38 = vsyncadd [#allocation6], %s37
      %s39 = sshll.u32 [#allocation5], 4
      %s40 = int_to_ptr.vmem [resolvable:$true] %s39
      %45 = dma.hbm_to_vmem [thread:$0]  %s1, 2048, %s40, [#allocation6], 128, 128, 8
    $region9: #{tpu_custom_call.1} parent=1 // pred_fallthru
      _
    // Predicated region
    $region10: #{tpu_custom_call.1} parent=1 // pred_check
      _
    $region11: #{tpu_custom_call.1} parent=1 // pred_check_branch
      %47 = sbr.rel (0) target = $region13
    $region12: #{tpu_custom_call.1} parent=1 // pred_region
      _
    $region13: #{tpu_custom_call.1} parent=1 // pred_fallthru
      _
    // Predicated region
    $region14: #{tpu_custom_call.1} parent=1 // pred_check
      _
    $region15: #{tpu_custom_call.1} parent=1 // pred_check_branch
      %49 = sbr.rel (0) target = $region17
    $region16: #{tpu_custom_call.1} parent=1 // pred_region
      _
    $region17: #{tpu_custom_call.1} parent=1 // pred_fallthru
      _
    // Predicated region
    $region18: #{tpu_custom_call.1} parent=1 // pred_check
      _
    $region19: #{tpu_custom_call.1} parent=1 // pred_check_branch
      %51 = sbr.rel (0) target = $region21
    $region20: #{tpu_custom_call.1} parent=1 // pred_region
      %s53 = ssub.s32 128, 128
      %54 = vsyncadd [#allocation6], %s53
      %s56 = sshll.u32 [#allocation7], 4
      %s57 = int_to_ptr.vmem [resolvable:$true] %s56
      %59 = dma.hbm_to_vmem [thread:$0]  %s4, 128, %s57, [#allocation6]
    $region21: #{tpu_custom_call.1} parent=1 // pred_fallthru
      _
    // Predicated region
    $region22: #{tpu_custom_call.1} parent=1 // pred_check
      _
    $region23: #{tpu_custom_call.1} parent=1 // pred_check_branch
      %61 = sbr.rel (0) target = $region25
    $region24: #{tpu_custom_call.1} parent=1 // pred_region
      %s63 = ssub.s32 16384, 16384
      %64 = vsyncadd [#allocation9], %s63
      %s65 = sshll.u32 [#allocation8], 4
      %s66 = int_to_ptr.vmem [resolvable:$true] %s65
      %71 = dma.hbm_to_vmem [thread:$0]  %s5, 16384, %s66, [#allocation9], 512, 512, 32
    $region25: #{tpu_custom_call.1} parent=1 // pred_fallthru
      _
    // Predicated region
    $region26: #{tpu_custom_call.1} parent=1 // pred_check
      _
    $region27: #{tpu_custom_call.1} parent=1 // pred_check_branch
      %73 = sbr.rel (0) target = $region29
    $region28: #{tpu_custom_call.1} parent=1 // pred_region
      %s75 = ssub.s32 8192, 8192
      %76 = vsyncadd [#allocation9], %s75
      %s77 = sshll.u32 [#allocation10], 4
      %s78 = int_to_ptr.vmem [resolvable:$true] %s77
      %83 = dma.hbm_to_vmem [thread:$0]  %s6, 8192, %s78, [#allocation9], 512, 512, 32
    $region29: #{tpu_custom_call.1} parent=1 // pred_fallthru
      _
    // Predicated region
    $region30: #{tpu_custom_call.1} parent=1 // pred_check
      _
    $region31: #{tpu_custom_call.1} parent=1 // pred_check_branch
      %85 = sbr.rel (0) target = $region33
    $region32: #{tpu_custom_call.1} parent=1 // pred_region
      %s87 = ssub.s32 16384, 16384
      %88 = vsyncadd [#allocation12], %s87
      %s89 = sshll.u32 [#allocation11], 4
      %s90 = int_to_ptr.vmem [resolvable:$true] %s89
      %95 = dma.hbm_to_vmem [thread:$0]  %s7, 16384, %s90, [#allocation12], 512, 512, 32
    $region33: #{tpu_custom_call.1} parent=1 // pred_fallthru
      _
    // Predicated region
    $region34: #{tpu_custom_call.1} parent=1 // pred_check
      _
    $region35: #{tpu_custom_call.1} parent=1 // pred_check_branch
      %97 = sbr.rel (0) target = $region37
    $region36: #{tpu_custom_call.1} parent=1 // pred_region
      _
    $region37: #{tpu_custom_call.1} parent=1 // pred_fallthru
      _
    // Predicated region
    $region38: #{tpu_custom_call.1} parent=1 // pred_check
      _
    $region39: #{tpu_custom_call.1} parent=1 // pred_check_branch
      %99 = sbr.rel (0) target = $region41
    $region40: #{tpu_custom_call.1} parent=1 // pred_region
      %100 = dma.done [#allocation3], 2048
    $region41: #{tpu_custom_call.1} parent=1 // pred_fallthru
      _
    // Predicated region
    $region42: #{tpu_custom_call.1} parent=1 // pred_check
      _
    $region43: #{tpu_custom_call.1} parent=1 // pred_check_branch
      %102 = sbr.rel (0) target = $region45
    $region44: #{tpu_custom_call.1} parent=1 // pred_region
      %103 = dma.done [#allocation6], 2048
    $region45: #{tpu_custom_call.1} parent=1 // pred_fallthru
      _
    // Predicated region
    $region46: #{tpu_custom_call.1} parent=1 // pred_check
      _
    $region47: #{tpu_custom_call.1} parent=1 // pred_check_branch
      %105 = sbr.rel (0) target = $region49
    $region48: #{tpu_custom_call.1} parent=1 // pred_region
      %106 = dma.done [#allocation6], 128
    $region49: #{tpu_custom_call.1} parent=1 // pred_fallthru
      _
    // Predicated region
    $region50: #{tpu_custom_call.1} parent=1 // pred_check
      _
    $region51: #{tpu_custom_call.1} parent=1 // pred_check_branch
      %108 = sbr.rel (0) target = $region53
    $region52: #{tpu_custom_call.1} parent=1 // pred_region
      %109 = dma.done [#allocation9], 16384
    $region53: #{tpu_custom_call.1} parent=1 // pred_fallthru
      _
    // Predicated region
    $region54: #{tpu_custom_call.1} parent=1 // pred_check
      _
    $region55: #{tpu_custom_call.1} parent=1 // pred_check_branch
      %111 = sbr.rel (0) target = $region57
    $region56: #{tpu_custom_call.1} parent=1 // pred_region
      %112 = dma.done [#allocation9], 8192
    $region57: #{tpu_custom_call.1} parent=1 // pred_fallthru
      _
    // Predicated region
    $region58: #{tpu_custom_call.1} parent=1 // pred_check
      _
    $region59: #{tpu_custom_call.1} parent=1 // pred_check_branch
      %114 = sbr.rel (0) target = $region61
    $region60: #{tpu_custom_call.1} parent=1 // pred_region
      %115 = dma.done [#allocation12], 16384
    $region61: #{tpu_custom_call.1} parent=1 // pred_fallthru
      _
    %v116 = vld [vmem:[#allocation2] sm:$0xff]
    %v117 = vld [vmem:[#allocation2 + $0x8] sm:$0xff]
    %v118 = vld [vmem:[#allocation2 + $0x10] sm:$0xff]
    %v119 = vld [vmem:[#allocation2 + $0x18] sm:$0xff]
    %v120 = vld [vmem:[#allocation2 + $0x20] sm:$0xff]
    %v121 = vld [vmem:[#allocation2 + $0x28] sm:$0xff]
    %v122 = vld [vmem:[#allocation2 + $0x30] sm:$0xff]
    %v123 = vld [vmem:[#allocation2 + $0x38] sm:$0xff]
    %v124 = vld [vmem:[#allocation2 + $0x40] sm:$0xff]
    %v125 = vld [vmem:[#allocation2 + $0x48] sm:$0xff]
    %v126 = vld [vmem:[#allocation2 + $0x50] sm:$0xff]
    %v127 = vld [vmem:[#allocation2 + $0x58] sm:$0xff]
    %v128 = vld [vmem:[#allocation2 + $0x60] sm:$0xff]
    %v129 = vld [vmem:[#allocation2 + $0x68] sm:$0xff]
    %v130 = vld [vmem:[#allocation2 + $0x70] sm:$0xff]
    %v131 = vld [vmem:[#allocation2 + $0x78] sm:$0xff]
    %v132 = vld [vmem:[#allocation5] sm:$0xff]
    %v133 = vld [vmem:[#allocation5 + $0x8] sm:$0xff]
    %v134 = vld [vmem:[#allocation5 + $0x10] sm:$0xff]
    %v135 = vld [vmem:[#allocation5 + $0x18] sm:$0xff]
    %v136 = vld [vmem:[#allocation5 + $0x20] sm:$0xff]
    %v137 = vld [vmem:[#allocation5 + $0x28] sm:$0xff]
    %v138 = vld [vmem:[#allocation5 + $0x30] sm:$0xff]
    %v139 = vld [vmem:[#allocation5 + $0x38] sm:$0xff]
    %v140 = vld [vmem:[#allocation5 + $0x40] sm:$0xff]
    %v141 = vld [vmem:[#allocation5 + $0x48] sm:$0xff]
    %v142 = vld [vmem:[#allocation5 + $0x50] sm:$0xff]
    %v143 = vld [vmem:[#allocation5 + $0x58] sm:$0xff]
    %v144 = vld [vmem:[#allocation5 + $0x60] sm:$0xff]
    %v145 = vld [vmem:[#allocation5 + $0x68] sm:$0xff]
    %v146 = vld [vmem:[#allocation5 + $0x70] sm:$0xff]
    %v147 = vld [vmem:[#allocation5 + $0x78] sm:$0xff]
    %v148 = vld [vmem:[%s2] sm:$0x1]
    %v149 = vlaneseq
    %v150 = vshrl.u32 %v149, 7
    %v151 = vlaneseq
    %v152 = vshrl.u32 %v151, 7
    %v153 = vsub.s32 0, %v152
    %v154 = vrot.slane %v148, %v153
    %vm155 = vcmp.eq.s32.totalorder %v154, %v150
    %v156 = vld [vmem:[#allocation8] sm:$0xff]
    %v157 = vld [vmem:[#allocation8 + $0x8] sm:$0xff]
    %v158 = vld [vmem:[#allocation8 + $0x10] sm:$0xff]
    %v159 = vld [vmem:[#allocation8 + $0x18] sm:$0xff]
    %v160 = vld [vmem:[#allocation8 + $0x20] sm:$0xff]
    %v161 = vld [vmem:[#allocation8 + $0x28] sm:$0xff]
    %v162 = vld [vmem:[#allocation8 + $0x30] sm:$0xff]
    %v163 = vld [vmem:[#allocation8 + $0x38] sm:$0xff]
    %v164 = vld [vmem:[#allocation8 + $0x40] sm:$0xff]
    %v165 = vld [vmem:[#allocation8 + $0x48] sm:$0xff]
    %v166 = vld [vmem:[#allocation8 + $0x50] sm:$0xff]
    %v167 = vld [vmem:[#allocation8 + $0x58] sm:$0xff]
    %v168 = vld [vmem:[#allocation8 + $0x60] sm:$0xff]
    %v169 = vld [vmem:[#allocation8 + $0x68] sm:$0xff]
    %v170 = vld [vmem:[#allocation8 + $0x70] sm:$0xff]
    %v171 = vld [vmem:[#allocation8 + $0x78] sm:$0xff]
    %v172 = vld [vmem:[#allocation8 + $0x80] sm:$0xff]
    %v173 = vld [vmem:[#allocation8 + $0x88] sm:$0xff]
    %v174 = vld [vmem:[#allocation8 + $0x90] sm:$0xff]
    %v175 = vld [vmem:[#allocation8 + $0x98] sm:$0xff]
    %v176 = vld [vmem:[#allocation8 + $0xa0] sm:$0xff]
    %v177 = vld [vmem:[#allocation8 + $0xa8] sm:$0xff]
    %v178 = vld [vmem:[#allocation8 + $0xb0] sm:$0xff]
    %v179 = vld [vmem:[#allocation8 + $0xb8] sm:$0xff]
    %v180 = vld [vmem:[#allocation8 + $0xc0] sm:$0xff]
    %v181 = vld [vmem:[#allocation8 + $0xc8] sm:$0xff]
    %v182 = vld [vmem:[#allocation8 + $0xd0] sm:$0xff]
    %v183 = vld [vmem:[#allocation8 + $0xd8] sm:$0xff]
    %v184 = vld [vmem:[#allocation8 + $0xe0] sm:$0xff]
    %v185 = vld [vmem:[#allocation8 + $0xe8] sm:$0xff]
    %v186 = vld [vmem:[#allocation8 + $0xf0] sm:$0xff]
    %v187 = vld [vmem:[#allocation8 + $0xf8] sm:$0xff]
    %v188 = vld [vmem:[#allocation8 + $0x100] sm:$0xff]
    %v189 = vld [vmem:[#allocation8 + $0x108] sm:$0xff]
    %v190 = vld [vmem:[#allocation8 + $0x110] sm:$0xff]
    %v191 = vld [vmem:[#allocation8 + $0x118] sm:$0xff]
    %v192 = vld [vmem:[#allocation8 + $0x120] sm:$0xff]
    %v193 = vld [vmem:[#allocation8 + $0x128] sm:$0xff]
    %v194 = vld [vmem:[#allocation8 + $0x130] sm:$0xff]
    %v195 = vld [vmem:[#allocation8 + $0x138] sm:$0xff]
    %v196 = vld [vmem:[#allocation8 + $0x140] sm:$0xff]
    %v197 = vld [vmem:[#allocation8 + $0x148] sm:$0xff]
    %v198 = vld [vmem:[#allocation8 + $0x150] sm:$0xff]
    %v199 = vld [vmem:[#allocation8 + $0x158] sm:$0xff]
    %v200 = vld [vmem:[#allocation8 + $0x160] sm:$0xff]
    %v201 = vld [vmem:[#allocation8 + $0x168] sm:$0xff]
    %v202 = vld [vmem:[#allocation8 + $0x170] sm:$0xff]
    %v203 = vld [vmem:[#allocation8 + $0x178] sm:$0xff]
    %v204 = vld [vmem:[#allocation8 + $0x180] sm:$0xff]
    %v205 = vld [vmem:[#allocation8 + $0x188] sm:$0xff]
    %v206 = vld [vmem:[#allocation8 + $0x190] sm:$0xff]
    %v207 = vld [vmem:[#allocation8 + $0x198] sm:$0xff]
    %v208 = vld [vmem:[#allocation8 + $0x1a0] sm:$0xff]
    %v209 = vld [vmem:[#allocation8 + $0x1a8] sm:$0xff]
    %v210 = vld [vmem:[#allocation8 + $0x1b0] sm:$0xff]
    %v211 = vld [vmem:[#allocation8 + $0x1b8] sm:$0xff]
    %v212 = vld [vmem:[#allocation8 + $0x1c0] sm:$0xff]
    %v213 = vld [vmem:[#allocation8 + $0x1c8] sm:$0xff]
    %v214 = vld [vmem:[#allocation8 + $0x1d0] sm:$0xff]
    %v215 = vld [vmem:[#allocation8 + $0x1d8] sm:$0xff]
    %v216 = vld [vmem:[#allocation8 + $0x1e0] sm:$0xff]
    %v217 = vld [vmem:[#allocation8 + $0x1e8] sm:$0xff]
    %v218 = vld [vmem:[#allocation8 + $0x1f0] sm:$0xff]
    %v219 = vld [vmem:[#allocation8 + $0x1f8] sm:$0xff]
    %s220 = scalar_lea.vmem [#allocation8], 512
    %v221 = vld [vmem:[%s220] sm:$0xff]
    %v222 = vld [vmem:[%s220 + $0x8] sm:$0xff]
    %v223 = vld [vmem:[%s220 + $0x10] sm:$0xff]
    %v224 = vld [vmem:[%s220 + $0x18] sm:$0xff]
    %v225 = vld [vmem:[%s220 + $0x20] sm:$0xff]
    %v226 = vld [vmem:[%s220 + $0x28] sm:$0xff]
    %v227 = vld [vmem:[%s220 + $0x30] sm:$0xff]
    %v228 = vld [vmem:[%s220 + $0x38] sm:$0xff]
    %v229 = vld [vmem:[%s220 + $0x40] sm:$0xff]
    %v230 = vld [vmem:[%s220 + $0x48] sm:$0xff]
    %v231 = vld [vmem:[%s220 + $0x50] sm:$0xff]
    %v232 = vld [vmem:[%s220 + $0x58] sm:$0xff]
    %v233 = vld [vmem:[%s220 + $0x60] sm:$0xff]
    %v234 = vld [vmem:[%s220 + $0x68] sm:$0xff]
    %v235 = vld [vmem:[%s220 + $0x70] sm:$0xff]
    %v236 = vld [vmem:[%s220 + $0x78] sm:$0xff]
    %v237 = vld [vmem:[%s220 + $0x80] sm:$0xff]
    %v238 = vld [vmem:[%s220 + $0x88] sm:$0xff]
    %v239 = vld [vmem:[%s220 + $0x90] sm:$0xff]
    %v240 = vld [vmem:[%s220 + $0x98] sm:$0xff]
    %v241 = vld [vmem:[%s220 + $0xa0] sm:$0xff]
    %v242 = vld [vmem:[%s220 + $0xa8] sm:$0xff]
    %v243 = vld [vmem:[%s220 + $0xb0] sm:$0xff]
    %v244 = vld [vmem:[%s220 + $0xb8] sm:$0xff]
    %v245 = vld [vmem:[%s220 + $0xc0] sm:$0xff]
    %v246 = vld [vmem:[%s220 + $0xc8] sm:$0xff]
    %v247 = vld [vmem:[%s220 + $0xd0] sm:$0xff]
    %v248 = vld [vmem:[%s220 + $0xd8] sm:$0xff]
    %v249 = vld [vmem:[%s220 + $0xe0] sm:$0xff]
    %v250 = vld [vmem:[%s220 + $0xe8] sm:$0xff]
    %v251 = vld [vmem:[%s220 + $0xf0] sm:$0xff]
    %v252 = vld [vmem:[%s220 + $0xf8] sm:$0xff]
    %v253 = vld [vmem:[%s220 + $0x100] sm:$0xff]
    %v254 = vld [vmem:[%s220 + $0x108] sm:$0xff]
    %v255 = vld [vmem:[%s220 + $0x110] sm:$0xff]
    %v256 = vld [vmem:[%s220 + $0x118] sm:$0xff]
    %v257 = vld [vmem:[%s220 + $0x120] sm:$0xff]
    %v258 = vld [vmem:[%s220 + $0x128] sm:$0xff]
    %v259 = vld [vmem:[%s220 + $0x130] sm:$0xff]
    %v260 = vld [vmem:[%s220 + $0x138] sm:$0xff]
    %v261 = vld [vmem:[%s220 + $0x140] sm:$0xff]
    %v262 = vld [vmem:[%s220 + $0x148] sm:$0xff]
    %v263 = vld [vmem:[%s220 + $0x150] sm:$0xff]
    %v264 = vld [vmem:[%s220 + $0x158] sm:$0xff]
    %v265 = vld [vmem:[%s220 + $0x160] sm:$0xff]
    %v266 = vld [vmem:[%s220 + $0x168] sm:$0xff]
    %v267 = vld [vmem:[%s220 + $0x170] sm:$0xff]
    %v268 = vld [vmem:[%s220 + $0x178] sm:$0xff]
    %v269 = vld [vmem:[%s220 + $0x180] sm:$0xff]
    %v270 = vld [vmem:[%s220 + $0x188] sm:$0xff]
    %v271 = vld [vmem:[%s220 + $0x190] sm:$0xff]
    %v272 = vld [vmem:[%s220 + $0x198] sm:$0xff]
    %v273 = vld [vmem:[%s220 + $0x1a0] sm:$0xff]
    %v274 = vld [vmem:[%s220 + $0x1a8] sm:$0xff]
    %v275 = vld [vmem:[%s220 + $0x1b0] sm:$0xff]
    %v276 = vld [vmem:[%s220 + $0x1b8] sm:$0xff]
    %v277 = vld [vmem:[%s220 + $0x1c0] sm:$0xff]
    %v278 = vld [vmem:[%s220 + $0x1c8] sm:$0xff]
    %v279 = vld [vmem:[%s220 + $0x1d0] sm:$0xff]
    %v280 = vld [vmem:[%s220 + $0x1d8] sm:$0xff]
    %v281 = vld [vmem:[%s220 + $0x1e0] sm:$0xff]
    %v282 = vld [vmem:[%s220 + $0x1e8] sm:$0xff]
    %v283 = vld [vmem:[%s220 + $0x1f0] sm:$0xff]
    %v284 = vld [vmem:[%s220 + $0x1f8] sm:$0xff]
    %v285 = vld [vmem:[#allocation11] sm:$0xff]
    %v286 = vld [vmem:[#allocation11 + $0x8] sm:$0xff]
    %v287 = vld [vmem:[#allocation11 + $0x10] sm:$0xff]
    %v288 = vld [vmem:[#allocation11 + $0x18] sm:$0xff]
    %v289 = vld [vmem:[#allocation11 + $0x20] sm:$0xff]
    %v290 = vld [vmem:[#allocation11 + $0x28] sm:$0xff]
    %v291 = vld [vmem:[#allocation11 + $0x30] sm:$0xff]
    %v292 = vld [vmem:[#allocation11 + $0x38] sm:$0xff]
    %v293 = vld [vmem:[#allocation11 + $0x40] sm:$0xff]
    %v294 = vld [vmem:[#allocation11 + $0x48] sm:$0xff]
    %v295 = vld [vmem:[#allocation11 + $0x50] sm:$0xff]
    %v296 = vld [vmem:[#allocation11 + $0x58] sm:$0xff]
    %v297 = vld [vmem:[#allocation11 + $0x60] sm:$0xff]
    %v298 = vld [vmem:[#allocation11 + $0x68] sm:$0xff]
    %v299 = vld [vmem:[#allocation11 + $0x70] sm:$0xff]
    %v300 = vld [vmem:[#allocation11 + $0x78] sm:$0xff]
    %v301 = vld [vmem:[#allocation11 + $0x80] sm:$0xff]
    %v302 = vld [vmem:[#allocation11 + $0x88] sm:$0xff]
    %v303 = vld [vmem:[#allocation11 + $0x90] sm:$0xff]
    %v304 = vld [vmem:[#allocation11 + $0x98] sm:$0xff]
    %v305 = vld [vmem:[#allocation11 + $0xa0] sm:$0xff]
    %v306 = vld [vmem:[#allocation11 + $0xa8] sm:$0xff]
    %v307 = vld [vmem:[#allocation11 + $0xb0] sm:$0xff]
    %v308 = vld [vmem:[#allocation11 + $0xb8] sm:$0xff]
    %v309 = vld [vmem:[#allocation11 + $0xc0] sm:$0xff]
    %v310 = vld [vmem:[#allocation11 + $0xc8] sm:$0xff]
    %v311 = vld [vmem:[#allocation11 + $0xd0] sm:$0xff]
    %v312 = vld [vmem:[#allocation11 + $0xd8] sm:$0xff]
    %v313 = vld [vmem:[#allocation11 + $0xe0] sm:$0xff]
    %v314 = vld [vmem:[#allocation11 + $0xe8] sm:$0xff]
    %v315 = vld [vmem:[#allocation11 + $0xf0] sm:$0xff]
    %v316 = vld [vmem:[#allocation11 + $0xf8] sm:$0xff]
    %v317 = vld [vmem:[#allocation11 + $0x100] sm:$0xff]
    %v318 = vld [vmem:[#allocation11 + $0x108] sm:$0xff]
    %v319 = vld [vmem:[#allocation11 + $0x110] sm:$0xff]
    %v320 = vld [vmem:[#allocation11 + $0x118] sm:$0xff]
    %v321 = vld [vmem:[#allocation11 + $0x120] sm:$0xff]
    %v322 = vld [vmem:[#allocation11 + $0x128] sm:$0xff]
    %v323 = vld [vmem:[#allocation11 + $0x130] sm:$0xff]
    %v324 = vld [vmem:[#allocation11 + $0x138] sm:$0xff]
    %v325 = vld [vmem:[#allocation11 + $0x140] sm:$0xff]
    %v326 = vld [vmem:[#allocation11 + $0x148] sm:$0xff]
    %v327 = vld [vmem:[#allocation11 + $0x150] sm:$0xff]
    %v328 = vld [vmem:[#allocation11 + $0x158] sm:$0xff]
    %v329 = vld [vmem:[#allocation11 + $0x160] sm:$0xff]
    %v330 = vld [vmem:[#allocation11 + $0x168] sm:$0xff]
    %v331 = vld [vmem:[#allocation11 + $0x170] sm:$0xff]
    %v332 = vld [vmem:[#allocation11 + $0x178] sm:$0xff]
    %v333 = vld [vmem:[#allocation11 + $0x180] sm:$0xff]
    %v334 = vld [vmem:[#allocation11 + $0x188] sm:$0xff]
    %v335 = vld [vmem:[#allocation11 + $0x190] sm:$0xff]
    %v336 = vld [vmem:[#allocation11 + $0x198] sm:$0xff]
    %v337 = vld [vmem:[#allocation11 + $0x1a0] sm:$0xff]
    %v338 = vld [vmem:[#allocation11 + $0x1a8] sm:$0xff]
    %v339 = vld [vmem:[#allocation11 + $0x1b0] sm:$0xff]
    %v340 = vld [vmem:[#allocation11 + $0x1b8] sm:$0xff]
    %v341 = vld [vmem:[#allocation11 + $0x1c0] sm:$0xff]
    %v342 = vld [vmem:[#allocation11 + $0x1c8] sm:$0xff]
    %v343 = vld [vmem:[#allocation11 + $0x1d0] sm:$0xff]
    %v344 = vld [vmem:[#allocation11 + $0x1d8] sm:$0xff]
    %v345 = vld [vmem:[#allocation11 + $0x1e0] sm:$0xff]
    %v346 = vld [vmem:[#allocation11 + $0x1e8] sm:$0xff]
    %v347 = vld [vmem:[#allocation11 + $0x1f0] sm:$0xff]
    %v348 = vld [vmem:[#allocation11 + $0x1f8] sm:$0xff]
    %s349 = scalar_lea.vmem [#allocation11], 512
    %v350 = vld [vmem:[%s349] sm:$0xff]
    %v351 = vld [vmem:[%s349 + $0x8] sm:$0xff]
    %v352 = vld [vmem:[%s349 + $0x10] sm:$0xff]
    %v353 = vld [vmem:[%s349 + $0x18] sm:$0xff]
    %v354 = vld [vmem:[%s349 + $0x20] sm:$0xff]
    %v355 = vld [vmem:[%s349 + $0x28] sm:$0xff]
    %v356 = vld [vmem:[%s349 + $0x30] sm:$0xff]
    %v357 = vld [vmem:[%s349 + $0x38] sm:$0xff]
    %v358 = vld [vmem:[%s349 + $0x40] sm:$0xff]
    %v359 = vld [vmem:[%s349 + $0x48] sm:$0xff]
    %v360 = vld [vmem:[%s349 + $0x50] sm:$0xff]
    %v361 = vld [vmem:[%s349 + $0x58] sm:$0xff]
    %v362 = vld [vmem:[%s349 + $0x60] sm:$0xff]
    %v363 = vld [vmem:[%s349 + $0x68] sm:$0xff]
    %v364 = vld [vmem:[%s349 + $0x70] sm:$0xff]
    %v365 = vld [vmem:[%s349 + $0x78] sm:$0xff]
    %v366 = vld [vmem:[%s349 + $0x80] sm:$0xff]
    %v367 = vld [vmem:[%s349 + $0x88] sm:$0xff]
    %v368 = vld [vmem:[%s349 + $0x90] sm:$0xff]
    %v369 = vld [vmem:[%s349 + $0x98] sm:$0xff]
    %v370 = vld [vmem:[%s349 + $0xa0] sm:$0xff]
    %v371 = vld [vmem:[%s349 + $0xa8] sm:$0xff]
    %v372 = vld [vmem:[%s349 + $0xb0] sm:$0xff]
    %v373 = vld [vmem:[%s349 + $0xb8] sm:$0xff]
    %v374 = vld [vmem:[%s349 + $0xc0] sm:$0xff]
    %v375 = vld [vmem:[%s349 + $0xc8] sm:$0xff]
    %v376 = vld [vmem:[%s349 + $0xd0] sm:$0xff]
    %v377 = vld [vmem:[%s349 + $0xd8] sm:$0xff]
    %v378 = vld [vmem:[%s349 + $0xe0] sm:$0xff]
    %v379 = vld [vmem:[%s349 + $0xe8] sm:$0xff]
    %v380 = vld [vmem:[%s349 + $0xf0] sm:$0xff]
    %v381 = vld [vmem:[%s349 + $0xf8] sm:$0xff]
    %v382 = vld [vmem:[%s349 + $0x100] sm:$0xff]
    %v383 = vld [vmem:[%s349 + $0x108] sm:$0xff]
    %v384 = vld [vmem:[%s349 + $0x110] sm:$0xff]
    %v385 = vld [vmem:[%s349 + $0x118] sm:$0xff]
    %v386 = vld [vmem:[%s349 + $0x120] sm:$0xff]
    %v387 = vld [vmem:[%s349 + $0x128] sm:$0xff]
    %v388 = vld [vmem:[%s349 + $0x130] sm:$0xff]
    %v389 = vld [vmem:[%s349 + $0x138] sm:$0xff]
    %v390 = vld [vmem:[%s349 + $0x140] sm:$0xff]
    %v391 = vld [vmem:[%s349 + $0x148] sm:$0xff]
    %v392 = vld [vmem:[%s349 + $0x150] sm:$0xff]
    %v393 = vld [vmem:[%s349 + $0x158] sm:$0xff]
    %v394 = vld [vmem:[%s349 + $0x160] sm:$0xff]
    %v395 = vld [vmem:[%s349 + $0x168] sm:$0xff]
    %v396 = vld [vmem:[%s349 + $0x170] sm:$0xff]
    %v397 = vld [vmem:[%s349 + $0x178] sm:$0xff]
    %v398 = vld [vmem:[%s349 + $0x180] sm:$0xff]
    %v399 = vld [vmem:[%s349 + $0x188] sm:$0xff]
    %v400 = vld [vmem:[%s349 + $0x190] sm:$0xff]
    %v401 = vld [vmem:[%s349 + $0x198] sm:$0xff]
    %v402 = vld [vmem:[%s349 + $0x1a0] sm:$0xff]
    %v403 = vld [vmem:[%s349 + $0x1a8] sm:$0xff]
    %v404 = vld [vmem:[%s349 + $0x1b0] sm:$0xff]
    %v405 = vld [vmem:[%s349 + $0x1b8] sm:$0xff]
    %v406 = vld [vmem:[%s349 + $0x1c0] sm:$0xff]
    %v407 = vld [vmem:[%s349 + $0x1c8] sm:$0xff]
    %v408 = vld [vmem:[%s349 + $0x1d0] sm:$0xff]
    %v409 = vld [vmem:[%s349 + $0x1d8] sm:$0xff]
    %v410 = vld [vmem:[%s349 + $0x1e0] sm:$0xff]
    %v411 = vld [vmem:[%s349 + $0x1e8] sm:$0xff]
    %v412 = vld [vmem:[%s349 + $0x1f0] sm:$0xff]
    %v413 = vld [vmem:[%s349 + $0x1f8] sm:$0xff]
    %v414 = vld [vmem:[#allocation10] sm:$0xff]
    %v415 = vld [vmem:[#allocation10 + $0x8] sm:$0xff]
    %v416 = vld [vmem:[#allocation10 + $0x10] sm:$0xff]
    %v417 = vld [vmem:[#allocation10 + $0x18] sm:$0xff]
    %v418 = vld [vmem:[#allocation10 + $0x20] sm:$0xff]
    %v419 = vld [vmem:[#allocation10 + $0x28] sm:$0xff]
    %v420 = vld [vmem:[#allocation10 + $0x30] sm:$0xff]
    %v421 = vld [vmem:[#allocation10 + $0x38] sm:$0xff]
    %v422 = vld [vmem:[#allocation10 + $0x40] sm:$0xff]
    %v423 = vld [vmem:[#allocation10 + $0x48] sm:$0xff]
    %v424 = vld [vmem:[#allocation10 + $0x50] sm:$0xff]
    %v425 = vld [vmem:[#allocation10 + $0x58] sm:$0xff]
    %v426 = vld [vmem:[#allocation10 + $0x60] sm:$0xff]
    %v427 = vld [vmem:[#allocation10 + $0x68] sm:$0xff]
    %v428 = vld [vmem:[#allocation10 + $0x70] sm:$0xff]
    %v429 = vld [vmem:[#allocation10 + $0x78] sm:$0xff]
    %v430 = vld [vmem:[#allocation10 + $0x80] sm:$0xff]
    %v431 = vld [vmem:[#allocation10 + $0x88] sm:$0xff]
    %v432 = vld [vmem:[#allocation10 + $0x90] sm:$0xff]
    %v433 = vld [vmem:[#allocation10 + $0x98] sm:$0xff]
    %v434 = vld [vmem:[#allocation10 + $0xa0] sm:$0xff]
    %v435 = vld [vmem:[#allocation10 + $0xa8] sm:$0xff]
    %v436 = vld [vmem:[#allocation10 + $0xb0] sm:$0xff]
    %v437 = vld [vmem:[#allocation10 + $0xb8] sm:$0xff]
    %v438 = vld [vmem:[#allocation10 + $0xc0] sm:$0xff]
    %v439 = vld [vmem:[#allocation10 + $0xc8] sm:$0xff]
    %v440 = vld [vmem:[#allocation10 + $0xd0] sm:$0xff]
    %v441 = vld [vmem:[#allocation10 + $0xd8] sm:$0xff]
    %v442 = vld [vmem:[#allocation10 + $0xe0] sm:$0xff]
    %v443 = vld [vmem:[#allocation10 + $0xe8] sm:$0xff]
    %v444 = vld [vmem:[#allocation10 + $0xf0] sm:$0xff]
    %v445 = vld [vmem:[#allocation10 + $0xf8] sm:$0xff]
    %v446 = vld [vmem:[#allocation10 + $0x100] sm:$0xff]
    %v447 = vld [vmem:[#allocation10 + $0x108] sm:$0xff]
    %v448 = vld [vmem:[#allocation10 + $0x110] sm:$0xff]
    %v449 = vld [vmem:[#allocation10 + $0x118] sm:$0xff]
    %v450 = vld [vmem:[#allocation10 + $0x120] sm:$0xff]
    %v451 = vld [vmem:[#allocation10 + $0x128] sm:$0xff]
    %v452 = vld [vmem:[#allocation10 + $0x130] sm:$0xff]
    %v453 = vld [vmem:[#allocation10 + $0x138] sm:$0xff]
    %v454 = vld [vmem:[#allocation10 + $0x140] sm:$0xff]
    %v455 = vld [vmem:[#allocation10 + $0x148] sm:$0xff]
    %v456 = vld [vmem:[#allocation10 + $0x150] sm:$0xff]
    %v457 = vld [vmem:[#allocation10 + $0x158] sm:$0xff]
    %v458 = vld [vmem:[#allocation10 + $0x160] sm:$0xff]
    %v459 = vld [vmem:[#allocation10 + $0x168] sm:$0xff]
    %v460 = vld [vmem:[#allocation10 + $0x170] sm:$0xff]
    %v461 = vld [vmem:[#allocation10 + $0x178] sm:$0xff]
    %v462 = vld [vmem:[#allocation10 + $0x180] sm:$0xff]
    %v463 = vld [vmem:[#allocation10 + $0x188] sm:$0xff]
    %v464 = vld [vmem:[#allocation10 + $0x190] sm:$0xff]
    %v465 = vld [vmem:[#allocation10 + $0x198] sm:$0xff]
    %v466 = vld [vmem:[#allocation10 + $0x1a0] sm:$0xff]
    %v467 = vld [vmem:[#allocation10 + $0x1a8] sm:$0xff]
    %v468 = vld [vmem:[#allocation10 + $0x1b0] sm:$0xff]
    %v469 = vld [vmem:[#allocation10 + $0x1b8] sm:$0xff]
    %v470 = vld [vmem:[#allocation10 + $0x1c0] sm:$0xff]
    %v471 = vld [vmem:[#allocation10 + $0x1c8] sm:$0xff]
    %v472 = vld [vmem:[#allocation10 + $0x1d0] sm:$0xff]
    %v473 = vld [vmem:[#allocation10 + $0x1d8] sm:$0xff]
    %v474 = vld [vmem:[#allocation10 + $0x1e0] sm:$0xff]
    %v475 = vld [vmem:[#allocation10 + $0x1e8] sm:$0xff]
    %v476 = vld [vmem:[#allocation10 + $0x1f0] sm:$0xff]
    %v477 = vld [vmem:[#allocation10 + $0x1f8] sm:$0xff]
    %v478 = vld [vmem:[%s8] sm:$0xf]
    %v480 = vlaneseq
    %v481 = vshrl.u32 %v480, 7
    %v482 = vsub.s32 0, %v481
    %v483 = vrot.slane %v478, %v482
    %v484 = vlaneseq
    %v485 = vshrl.u32 %v484, 7
    %v486 = vsub.s32 1, %v485
    %v487 = vrot.slane %v478, %v486
    %v488 = vlaneseq
    %v489 = vshrl.u32 %v488, 7
    %v490 = vsub.s32 2, %v489
    %v491 = vrot.slane %v478, %v490
    %v492 = vlaneseq
    %v493 = vshrl.u32 %v492, 7
    %v494 = vsub.s32 3, %v493
    %v495 = vrot.slane %v478, %v494
    %s500 = scalar_lea.vmem %s8, 4
    %v501 = vld [vmem:[%s500] sm:$0xf]
    %v503 = vlaneseq
    %v504 = vshrl.u32 %v503, 7
    %v505 = vsub.s32 0, %v504
    %v506 = vrot.slane %v501, %v505
    %v507 = vlaneseq
    %v508 = vshrl.u32 %v507, 7
    %v509 = vsub.s32 1, %v508
    %v510 = vrot.slane %v501, %v509
    %v511 = vlaneseq
    %v512 = vshrl.u32 %v511, 7
    %v513 = vsub.s32 2, %v512
    %v514 = vrot.slane %v501, %v513
    %v515 = vlaneseq
    %v516 = vshrl.u32 %v515, 7
    %v517 = vsub.s32 3, %v516
    %v518 = vrot.slane %v501, %v517
    %v523 = vld [vmem:[%s3] sm:$0xff]
    %v524 = vld [vmem:[#allocation7] sm:$0xff]
    loop: start=0, step=1, limit=3
    $region62: #{tpu_custom_call.1} parent=1 // loop_pre_header
      _
    $region63: #{tpu_custom_call.1} parent=1 // loop_header
      %s526 = sphi 0, %s530
      %p527 = scmp.ge.s32.totalorder %s526, 3
      %v531 = vphi %v523, %v1306
      %v532 = vphi %v524, %v1456
      %v533 = vphi 0.0, %v994
      %v534 = vphi 0.0, %v1306
      %v535 = vphi 0.0, %v992
      %v536 = vphi 0.0, %v1304
    $region64: #{tpu_custom_call.1} parent=1 // loop_header_branch
      %529 = sbr.rel (%p527) target = $region68
    $region65: #{tpu_custom_call.1} parent=1 // loop_body
      %537 = vmatprep.subr.mxu0 %v415
      %538 = vmatpush1.msra.mxu0 %v414
      %539 = vmatprep.subr.mxu0 %v419
      %540 = vmatpush1.msra.mxu0 %v418
      %541 = vmatprep.subr.mxu0 %v423
      %542 = vmatpush1.msra.mxu0 %v422
      %543 = vmatprep.subr.mxu0 %v427
      %544 = vmatpush1.msra.mxu0 %v426
      %545 = vmatprep.subr.mxu0 %v431
      %546 = vmatpush1.msra.mxu0 %v430
      %547 = vmatprep.subr.mxu0 %v435
      %548 = vmatpush1.msra.mxu0 %v434
      %549 = vmatprep.subr.mxu0 %v439
      %550 = vmatpush1.msra.mxu0 %v438
      %551 = vmatprep.subr.mxu0 %v443
      %552 = vmatpush1.msra.mxu0 %v442
      %553 = vmatprep.subr.mxu0 %v447
      %554 = vmatpush1.msra.mxu0 %v446
      %555 = vmatprep.subr.mxu0 %v451
      %556 = vmatpush1.msra.mxu0 %v450
      %557 = vmatprep.subr.mxu0 %v455
      %558 = vmatpush1.msra.mxu0 %v454
      %559 = vmatprep.subr.mxu0 %v459
      %560 = vmatpush1.msra.mxu0 %v458
      %561 = vmatprep.subr.mxu0 %v463
      %562 = vmatpush1.msra.mxu0 %v462
      %563 = vmatprep.subr.mxu0 %v467
      %564 = vmatpush1.msra.mxu0 %v466
      %565 = vmatprep.subr.mxu0 %v471
      %566 = vmatpush1.msra.mxu0 %v470
      %567 = vmatprep.subr.mxu0 %v475
      %568 = vmatpush1.msra.mxu0 %v474
      %569 = vmatprep.subr.mxu0 0.0
      %570 = vmatpush1.msra.mxu0 0.0
      %571 = vmatprep.subr.mxu0 0.0
      %572 = vmatpush1.msra.mxu0 0.0
      %573 = vmatprep.subr.mxu0 0.0
      %574 = vmatpush1.msra.mxu0 0.0
      %575 = vmatprep.subr.mxu0 0.0
      %576 = vmatpush1.msra.mxu0 0.0
      %577 = vmatprep.subr.mxu0 0.0
      %578 = vmatpush1.msra.mxu0 0.0
      %579 = vmatprep.subr.mxu0 0.0
      %580 = vmatpush1.msra.mxu0 0.0
      %581 = vmatprep.subr.mxu0 0.0
      %582 = vmatpush1.msra.mxu0 0.0
      %583 = vmatprep.subr.mxu0 0.0
      %584 = vmatpush1.msra.mxu0 0.0
      %585 = vmatprep.subr.mxu0 0.0
      %586 = vmatpush1.msra.mxu0 0.0
      %587 = vmatprep.subr.mxu0 0.0
      %588 = vmatpush1.msra.mxu0 0.0
      %589 = vmatprep.subr.mxu0 0.0
      %590 = vmatpush1.msra.mxu0 0.0
      %591 = vmatprep.subr.mxu0 0.0
      %592 = vmatpush1.msra.mxu0 0.0
      %593 = vmatprep.subr.mxu0 0.0
      %594 = vmatpush1.msra.mxu0 0.0
      %595 = vmatprep.subr.mxu0 0.0
      %596 = vmatpush1.msra.mxu0 0.0
      %597 = vmatprep.subr.mxu0 0.0
      %598 = vmatpush1.msra.mxu0 0.0
      %599 = vmatprep.subr.mxu0 0.0
      %600 = vmatpush1.msra.mxu0 0.0
      %601 = vmatprep.mubr.f32.mxu0 0.0
      %602 = vmatmul.mubr.f32.gmra.mrb[0].mxu0 %v532
      %v603 = vpop.f32.mrb[0].mxu0
      %v604 = vadd.f32 0.0, %v603
      %v605 = vpop.f32.mrb[0].mxu0
      %v606 = vadd.f32 0.0, %v605
      %607 = vdwg.mxu0
      %608 = vmatprep.subr.mxu0 %v417
      %609 = vmatpush1.msra.mxu0 %v416
      %610 = vmatprep.subr.mxu0 %v421
      %611 = vmatpush1.msra.mxu0 %v420
      %612 = vmatprep.subr.mxu0 %v425
      %613 = vmatpush1.msra.mxu0 %v424
      %614 = vmatprep.subr.mxu0 %v429
      %615 = vmatpush1.msra.mxu0 %v428
      %616 = vmatprep.subr.mxu0 %v433
      %617 = vmatpush1.msra.mxu0 %v432
      %618 = vmatprep.subr.mxu0 %v437
      %619 = vmatpush1.msra.mxu0 %v436
      %620 = vmatprep.subr.mxu0 %v441
      %621 = vmatpush1.msra.mxu0 %v440
      %622 = vmatprep.subr.mxu0 %v445
      %623 = vmatpush1.msra.mxu0 %v444
      %624 = vmatprep.subr.mxu0 %v449
      %625 = vmatpush1.msra.mxu0 %v448
      %626 = vmatprep.subr.mxu0 %v453
      %627 = vmatpush1.msra.mxu0 %v452
      %628 = vmatprep.subr.mxu0 %v457
      %629 = vmatpush1.msra.mxu0 %v456
      %630 = vmatprep.subr.mxu0 %v461
      %631 = vmatpush1.msra.mxu0 %v460
      %632 = vmatprep.subr.mxu0 %v465
      %633 = vmatpush1.msra.mxu0 %v464
      %634 = vmatprep.subr.mxu0 %v469
      %635 = vmatpush1.msra.mxu0 %v468
      %636 = vmatprep.subr.mxu0 %v473
      %637 = vmatpush1.msra.mxu0 %v472
      %638 = vmatprep.subr.mxu0 %v477
      %639 = vmatpush1.msra.mxu0 %v476
      %640 = vmatprep.subr.mxu0 0.0
      %641 = vmatpush1.msra.mxu0 0.0
      %642 = vmatprep.subr.mxu0 0.0
      %643 = vmatpush1.msra.mxu0 0.0
      %644 = vmatprep.subr.mxu0 0.0
      %645 = vmatpush1.msra.mxu0 0.0
      %646 = vmatprep.subr.mxu0 0.0
      %647 = vmatpush1.msra.mxu0 0.0
      %648 = vmatprep.subr.mxu0 0.0
      %649 = vmatpush1.msra.mxu0 0.0
      %650 = vmatprep.subr.mxu0 0.0
      %651 = vmatpush1.msra.mxu0 0.0
      %652 = vmatprep.subr.mxu0 0.0
      %653 = vmatpush1.msra.mxu0 0.0
      %654 = vmatprep.subr.mxu0 0.0
      %655 = vmatpush1.msra.mxu0 0.0
      %656 = vmatprep.subr.mxu0 0.0
      %657 = vmatpush1.msra.mxu0 0.0
      %658 = vmatprep.subr.mxu0 0.0
      %659 = vmatpush1.msra.mxu0 0.0
      %660 = vmatprep.subr.mxu0 0.0
      %661 = vmatpush1.msra.mxu0 0.0
      %662 = vmatprep.subr.mxu0 0.0
      %663 = vmatpush1.msra.mxu0 0.0
      %664 = vmatprep.subr.mxu0 0.0
      %665 = vmatpush1.msra.mxu0 0.0
      %666 = vmatprep.subr.mxu0 0.0
      %667 = vmatpush1.msra.mxu0 0.0
      %668 = vmatprep.subr.mxu0 0.0
      %669 = vmatpush1.msra.mxu0 0.0
      %670 = vmatprep.subr.mxu0 0.0
      %671 = vmatpush1.msra.mxu0 0.0
      %672 = vmatprep.mubr.f32.mxu0 0.0
      %673 = vmatmul.mubr.f32.gmra.mrb[0].mxu0 %v532
      %v674 = vpop.f32.mrb[0].mxu0
      %v675 = vadd.f32 0.0, %v674
      %v676 = vpop.f32.mrb[0].mxu0
      %v677 = vadd.f32 0.0, %v676
      %678 = vdwg.mxu0
      %679 = vmatprep.subr.mxu0 %v157
      %680 = vmatpush1.msra.mxu0 %v156
      %681 = vmatprep.subr.mxu0 %v161
      %682 = vmatpush1.msra.mxu0 %v160
      %683 = vmatprep.subr.mxu0 %v165
      %684 = vmatpush1.msra.mxu0 %v164
      %685 = vmatprep.subr.mxu0 %v169
      %686 = vmatpush1.msra.mxu0 %v168
      %687 = vmatprep.subr.mxu0 %v173
      %688 = vmatpush1.msra.mxu0 %v172
      %689 = vmatprep.subr.mxu0 %v177
      %690 = vmatpush1.msra.mxu0 %v176
      %691 = vmatprep.subr.mxu0 %v181
      %692 = vmatpush1.msra.mxu0 %v180
      %693 = vmatprep.subr.mxu0 %v185
      %694 = vmatpush1.msra.mxu0 %v184
      %695 = vmatprep.subr.mxu0 %v189
      %696 = vmatpush1.msra.mxu0 %v188
      %697 = vmatprep.subr.mxu0 %v193
      %698 = vmatpush1.msra.mxu0 %v192
      %699 = vmatprep.subr.mxu0 %v197
      %700 = vmatpush1.msra.mxu0 %v196
      %701 = vmatprep.subr.mxu0 %v201
      %702 = vmatpush1.msra.mxu0 %v200
      %703 = vmatprep.subr.mxu0 %v205
      %704 = vmatpush1.msra.mxu0 %v204
      %705 = vmatprep.subr.mxu0 %v209
      %706 = vmatpush1.msra.mxu0 %v208
      %707 = vmatprep.subr.mxu0 %v213
      %708 = vmatpush1.msra.mxu0 %v212
      %709 = vmatprep.subr.mxu0 %v217
      %710 = vmatpush1.msra.mxu0 %v216
      %711 = vmatprep.subr.mxu0 0.0
      %712 = vmatpush1.msra.mxu0 0.0
      %713 = vmatprep.subr.mxu0 0.0
      %714 = vmatpush1.msra.mxu0 0.0
      %715 = vmatprep.subr.mxu0 0.0
      %716 = vmatpush1.msra.mxu0 0.0
      %717 = vmatprep.subr.mxu0 0.0
      %718 = vmatpush1.msra.mxu0 0.0
      %719 = vmatprep.subr.mxu0 0.0
      %720 = vmatpush1.msra.mxu0 0.0
      %721 = vmatprep.subr.mxu0 0.0
      %722 = vmatpush1.msra.mxu0 0.0
      %723 = vmatprep.subr.mxu0 0.0
      %724 = vmatpush1.msra.mxu0 0.0
      %725 = vmatprep.subr.mxu0 0.0
      %726 = vmatpush1.msra.mxu0 0.0
      %727 = vmatprep.subr.mxu0 0.0
      %728 = vmatpush1.msra.mxu0 0.0
      %729 = vmatprep.subr.mxu0 0.0
      %730 = vmatpush1.msra.mxu0 0.0
      %731 = vmatprep.subr.mxu0 0.0
      %732 = vmatpush1.msra.mxu0 0.0
      %733 = vmatprep.subr.mxu0 0.0
      %734 = vmatpush1.msra.mxu0 0.0
      %735 = vmatprep.subr.mxu0 0.0
      %736 = vmatpush1.msra.mxu0 0.0
      %737 = vmatprep.subr.mxu0 0.0
      %738 = vmatpush1.msra.mxu0 0.0
      %739 = vmatprep.subr.mxu0 0.0
      %740 = vmatpush1.msra.mxu0 0.0
      %741 = vmatprep.subr.mxu0 0.0
      %742 = vmatpush1.msra.mxu0 0.0
      %743 = vmatprep.mubr.f32.mxu0 0.0
      %744 = vmatmul.mubr.f32.gmra.mrb[0].mxu0 %v531
      %v745 = vpop.f32.mrb[0].mxu0
      %v746 = vadd.f32 %v604, %v745
      %v747 = vpop.f32.mrb[0].mxu0
      %v748 = vadd.f32 %v606, %v747
      %749 = vdwg.mxu0
      %750 = vmatprep.subr.mxu0 %v159
      %751 = vmatpush1.msra.mxu0 %v158
      %752 = vmatprep.subr.mxu0 %v163
      %753 = vmatpush1.msra.mxu0 %v162
      %754 = vmatprep.subr.mxu0 %v167
      %755 = vmatpush1.msra.mxu0 %v166
      %756 = vmatprep.subr.mxu0 %v171
      %757 = vmatpush1.msra.mxu0 %v170
      %758 = vmatprep.subr.mxu0 %v175
      %759 = vmatpush1.msra.mxu0 %v174
      %760 = vmatprep.subr.mxu0 %v179
      %761 = vmatpush1.msra.mxu0 %v178
      %762 = vmatprep.subr.mxu0 %v183
      %763 = vmatpush1.msra.mxu0 %v182
      %764 = vmatprep.subr.mxu0 %v187
      %765 = vmatpush1.msra.mxu0 %v186
      %766 = vmatprep.subr.mxu0 %v191
      %767 = vmatpush1.msra.mxu0 %v190
      %768 = vmatprep.subr.mxu0 %v195
      %769 = vmatpush1.msra.mxu0 %v194
      %770 = vmatprep.subr.mxu0 %v199
      %771 = vmatpush1.msra.mxu0 %v198
      %772 = vmatprep.subr.mxu0 %v203
      %773 = vmatpush1.msra.mxu0 %v202
      %774 = vmatprep.subr.mxu0 %v207
      %775 = vmatpush1.msra.mxu0 %v206
      %776 = vmatprep.subr.mxu0 %v211
      %777 = vmatpush1.msra.mxu0 %v210
      %778 = vmatprep.subr.mxu0 %v215
      %779 = vmatpush1.msra.mxu0 %v214
      %780 = vmatprep.subr.mxu0 %v219
      %781 = vmatpush1.msra.mxu0 %v218
      %782 = vmatprep.subr.mxu0 0.0
      %783 = vmatpush1.msra.mxu0 0.0
      %784 = vmatprep.subr.mxu0 0.0
      %785 = vmatpush1.msra.mxu0 0.0
      %786 = vmatprep.subr.mxu0 0.0
      %787 = vmatpush1.msra.mxu0 0.0
      %788 = vmatprep.subr.mxu0 0.0
      %789 = vmatpush1.msra.mxu0 0.0
      %790 = vmatprep.subr.mxu0 0.0
      %791 = vmatpush1.msra.mxu0 0.0
      %792 = vmatprep.subr.mxu0 0.0
      %793 = vmatpush1.msra.mxu0 0.0
      %794 = vmatprep.subr.mxu0 0.0
      %795 = vmatpush1.msra.mxu0 0.0
      %796 = vmatprep.subr.mxu0 0.0
      %797 = vmatpush1.msra.mxu0 0.0
      %798 = vmatprep.subr.mxu0 0.0
      %799 = vmatpush1.msra.mxu0 0.0
      %800 = vmatprep.subr.mxu0 0.0
      %801 = vmatpush1.msra.mxu0 0.0
      %802 = vmatprep.subr.mxu0 0.0
      %803 = vmatpush1.msra.mxu0 0.0
      %804 = vmatprep.subr.mxu0 0.0
      %805 = vmatpush1.msra.mxu0 0.0
      %806 = vmatprep.subr.mxu0 0.0
      %807 = vmatpush1.msra.mxu0 0.0
      %808 = vmatprep.subr.mxu0 0.0
      %809 = vmatpush1.msra.mxu0 0.0
      %810 = vmatprep.subr.mxu0 0.0
      %811 = vmatpush1.msra.mxu0 0.0
      %812 = vmatprep.subr.mxu0 0.0
      %813 = vmatpush1.msra.mxu0 0.0
      %814 = vmatprep.mubr.f32.mxu0 0.0
      %815 = vmatmul.mubr.f32.gmra.mrb[0].mxu0 %v531
      %v816 = vpop.f32.mrb[0].mxu0
      %v817 = vadd.f32 %v675, %v816
      %v818 = vpop.f32.mrb[0].mxu0
      %v819 = vadd.f32 %v677, %v818
      %820 = vdwg.mxu0
      %821 = vmatprep.subr.mxu0 %v286
      %822 = vmatpush1.msra.mxu0 %v285
      %823 = vmatprep.subr.mxu0 %v290
      %824 = vmatpush1.msra.mxu0 %v289
      %825 = vmatprep.subr.mxu0 %v294
      %826 = vmatpush1.msra.mxu0 %v293
      %827 = vmatprep.subr.mxu0 %v298
      %828 = vmatpush1.msra.mxu0 %v297
      %829 = vmatprep.subr.mxu0 %v302
      %830 = vmatpush1.msra.mxu0 %v301
      %831 = vmatprep.subr.mxu0 %v306
      %832 = vmatpush1.msra.mxu0 %v305
      %833 = vmatprep.subr.mxu0 %v310
      %834 = vmatpush1.msra.mxu0 %v309
      %835 = vmatprep.subr.mxu0 %v314
      %836 = vmatpush1.msra.mxu0 %v313
      %837 = vmatprep.subr.mxu0 %v318
      %838 = vmatpush1.msra.mxu0 %v317
      %839 = vmatprep.subr.mxu0 %v322
      %840 = vmatpush1.msra.mxu0 %v321
      %841 = vmatprep.subr.mxu0 %v326
      %842 = vmatpush1.msra.mxu0 %v325
      %843 = vmatprep.subr.mxu0 %v330
      %844 = vmatpush1.msra.mxu0 %v329
      %845 = vmatprep.subr.mxu0 %v334
      %846 = vmatpush1.msra.mxu0 %v333
      %847 = vmatprep.subr.mxu0 %v338
      %848 = vmatpush1.msra.mxu0 %v337
      %849 = vmatprep.subr.mxu0 %v342
      %850 = vmatpush1.msra.mxu0 %v341
      %851 = vmatprep.subr.mxu0 %v346
      %852 = vmatpush1.msra.mxu0 %v345
      %853 = vmatprep.subr.mxu0 0.0
      %854 = vmatpush1.msra.mxu0 0.0
      %855 = vmatprep.subr.mxu0 0.0
      %856 = vmatpush1.msra.mxu0 0.0
      %857 = vmatprep.subr.mxu0 0.0
      %858 = vmatpush1.msra.mxu0 0.0
      %859 = vmatprep.subr.mxu0 0.0
      %860 = vmatpush1.msra.mxu0 0.0
      %861 = vmatprep.subr.mxu0 0.0
      %862 = vmatpush1.msra.mxu0 0.0
      %863 = vmatprep.subr.mxu0 0.0
      %864 = vmatpush1.msra.mxu0 0.0
      %865 = vmatprep.subr.mxu0 0.0
      %866 = vmatpush1.msra.mxu0 0.0
      %867 = vmatprep.subr.mxu0 0.0
      %868 = vmatpush1.msra.mxu0 0.0
      %869 = vmatprep.subr.mxu0 0.0
      %870 = vmatpush1.msra.mxu0 0.0
      %871 = vmatprep.subr.mxu0 0.0
      %872 = vmatpush1.msra.mxu0 0.0
      %873 = vmatprep.subr.mxu0 0.0
      %874 = vmatpush1.msra.mxu0 0.0
      %875 = vmatprep.subr.mxu0 0.0
      %876 = vmatpush1.msra.mxu0 0.0
      %877 = vmatprep.subr.mxu0 0.0
      %878 = vmatpush1.msra.mxu0 0.0
      %879 = vmatprep.subr.mxu0 0.0
      %880 = vmatpush1.msra.mxu0 0.0
      %881 = vmatprep.subr.mxu0 0.0
      %882 = vmatpush1.msra.mxu0 0.0
      %883 = vmatprep.subr.mxu0 0.0
      %884 = vmatpush1.msra.mxu0 0.0
      %885 = vmatprep.mubr.f32.mxu0 0.0
      %886 = vmatmul.mubr.f32.gmra.mrb[0].mxu0 %v533
      %v887 = vpop.f32.mrb[0].mxu0
      %v888 = vadd.f32 0.0, %v887
      %v889 = vpop.f32.mrb[0].mxu0
      %v890 = vadd.f32 0.0, %v889
      %891 = vdwg.mxu0
      %892 = vmatprep.subr.mxu0 %v288
      %893 = vmatpush1.msra.mxu0 %v287
      %894 = vmatprep.subr.mxu0 %v292
      %895 = vmatpush1.msra.mxu0 %v291
      %896 = vmatprep.subr.mxu0 %v296
      %897 = vmatpush1.msra.mxu0 %v295
      %898 = vmatprep.subr.mxu0 %v300
      %899 = vmatpush1.msra.mxu0 %v299
      %900 = vmatprep.subr.mxu0 %v304
      %901 = vmatpush1.msra.mxu0 %v303
      %902 = vmatprep.subr.mxu0 %v308
      %903 = vmatpush1.msra.mxu0 %v307
      %904 = vmatprep.subr.mxu0 %v312
      %905 = vmatpush1.msra.mxu0 %v311
      %906 = vmatprep.subr.mxu0 %v316
      %907 = vmatpush1.msra.mxu0 %v315
      %908 = vmatprep.subr.mxu0 %v320
      %909 = vmatpush1.msra.mxu0 %v319
      %910 = vmatprep.subr.mxu0 %v324
      %911 = vmatpush1.msra.mxu0 %v323
      %912 = vmatprep.subr.mxu0 %v328
      %913 = vmatpush1.msra.mxu0 %v327
      %914 = vmatprep.subr.mxu0 %v332
      %915 = vmatpush1.msra.mxu0 %v331
      %916 = vmatprep.subr.mxu0 %v336
      %917 = vmatpush1.msra.mxu0 %v335
      %918 = vmatprep.subr.mxu0 %v340
      %919 = vmatpush1.msra.mxu0 %v339
      %920 = vmatprep.subr.mxu0 %v344
      %921 = vmatpush1.msra.mxu0 %v343
      %922 = vmatprep.subr.mxu0 %v348
      %923 = vmatpush1.msra.mxu0 %v347
      %924 = vmatprep.subr.mxu0 0.0
      %925 = vmatpush1.msra.mxu0 0.0
      %926 = vmatprep.subr.mxu0 0.0
      %927 = vmatpush1.msra.mxu0 0.0
      %928 = vmatprep.subr.mxu0 0.0
      %929 = vmatpush1.msra.mxu0 0.0
      %930 = vmatprep.subr.mxu0 0.0
      %931 = vmatpush1.msra.mxu0 0.0
      %932 = vmatprep.subr.mxu0 0.0
      %933 = vmatpush1.msra.mxu0 0.0
      %934 = vmatprep.subr.mxu0 0.0
      %935 = vmatpush1.msra.mxu0 0.0
      %936 = vmatprep.subr.mxu0 0.0
      %937 = vmatpush1.msra.mxu0 0.0
      %938 = vmatprep.subr.mxu0 0.0
      %939 = vmatpush1.msra.mxu0 0.0
      %940 = vmatprep.subr.mxu0 0.0
      %941 = vmatpush1.msra.mxu0 0.0
      %942 = vmatprep.subr.mxu0 0.0
      %943 = vmatpush1.msra.mxu0 0.0
      %944 = vmatprep.subr.mxu0 0.0
      %945 = vmatpush1.msra.mxu0 0.0
      %946 = vmatprep.subr.mxu0 0.0
      %947 = vmatpush1.msra.mxu0 0.0
      %948 = vmatprep.subr.mxu0 0.0
      %949 = vmatpush1.msra.mxu0 0.0
      %950 = vmatprep.subr.mxu0 0.0
      %951 = vmatpush1.msra.mxu0 0.0
      %952 = vmatprep.subr.mxu0 0.0
      %953 = vmatpush1.msra.mxu0 0.0
      %954 = vmatprep.subr.mxu0 0.0
      %955 = vmatpush1.msra.mxu0 0.0
      %956 = vmatprep.mubr.f32.mxu0 0.0
      %957 = vmatmul.mubr.f32.gmra.mrb[0].mxu0 %v533
      %v958 = vpop.f32.mrb[0].mxu0
      %v959 = vadd.f32 0.0, %v958
      %v960 = vpop.f32.mrb[0].mxu0
      %v961 = vadd.f32 0.0, %v960
      %962 = vdwg.mxu0
      %v963 = vadd.f32 %v746, %v888
      %v964 = vadd.f32 %v748, %v890
      %v965 = vadd.f32 %v817, %v959
      %v966 = vadd.f32 %v819, %v961
      %v967 = vadd.f32 %v963, %v483
      %v968 = vadd.f32 %v964, %v487
      %v969 = vadd.f32 %v965, %v491
      %v970 = vadd.f32 %v966, %v495
      %v971 = vxor.u32 %v967, 2147483648
      %v972 = vmul.f32 %v971, 1.442695
      %v973 = vpow.pop %v972
      %v974 = vadd.f32 %v973, 1.0
      %v975 = vrcp.pop %v974
      %v976 = vmul.f32 1.0, %v975
      %v977 = vxor.u32 %v968, 2147483648
      %v978 = vmul.f32 %v977, 1.442695
      %v979 = vpow.pop %v978
      %v980 = vadd.f32 %v979, 1.0
      %v981 = vrcp.pop %v980
      %v982 = vmul.f32 1.0, %v981
      %v983 = vtanh.pop %v969
      %v984 = vxor.u32 %v970, 2147483648
      %v985 = vmul.f32 %v984, 1.442695
      %v986 = vpow.pop %v985
      %v987 = vadd.f32 %v986, 1.0
      %v988 = vrcp.pop %v987
      %v989 = vmul.f32 1.0, %v988
      %v990 = vmul.f32 %v982, %v535
      %v991 = vmul.f32 %v976, %v983
      %v992 = vadd.f32 %v990, %v991
      %v993 = vtanh.pop %v992
      %v994 = vmul.f32 %v989, %v993
      %995 = vmatprep.subr.mxu0 %v351
      %996 = vmatpush1.msra.mxu0 %v350
      %997 = vmatprep.subr.mxu0 %v355
      %998 = vmatpush1.msra.mxu0 %v354
      %999 = vmatprep.subr.mxu0 %v359
      %1000 = vmatpush1.msra.mxu0 %v358
      %1001 = vmatprep.subr.mxu0 %v363
      %1002 = vmatpush1.msra.mxu0 %v362
      %1003 = vmatprep.subr.mxu0 %v367
      %1004 = vmatpush1.msra.mxu0 %v366
      %1005 = vmatprep.subr.mxu0 %v371
      %1006 = vmatpush1.msra.mxu0 %v370
      %1007 = vmatprep.subr.mxu0 %v375
      %1008 = vmatpush1.msra.mxu0 %v374
      %1009 = vmatprep.subr.mxu0 %v379
      %1010 = vmatpush1.msra.mxu0 %v378
      %1011 = vmatprep.subr.mxu0 %v383
      %1012 = vmatpush1.msra.mxu0 %v382
      %1013 = vmatprep.subr.mxu0 %v387
      %1014 = vmatpush1.msra.mxu0 %v386
      %1015 = vmatprep.subr.mxu0 %v391
      %1016 = vmatpush1.msra.mxu0 %v390
      %1017 = vmatprep.subr.mxu0 %v395
      %1018 = vmatpush1.msra.mxu0 %v394
      %1019 = vmatprep.subr.mxu0 %v399
      %1020 = vmatpush1.msra.mxu0 %v398
      %1021 = vmatprep.subr.mxu0 %v403
      %1022 = vmatpush1.msra.mxu0 %v402
      %1023 = vmatprep.subr.mxu0 %v407
      %1024 = vmatpush1.msra.mxu0 %v406
      %1025 = vmatprep.subr.mxu0 %v411
      %1026 = vmatpush1.msra.mxu0 %v410
      %1027 = vmatprep.subr.mxu0 0.0
      %1028 = vmatpush1.msra.mxu0 0.0
      %1029 = vmatprep.subr.mxu0 0.0
      %1030 = vmatpush1.msra.mxu0 0.0
      %1031 = vmatprep.subr.mxu0 0.0
      %1032 = vmatpush1.msra.mxu0 0.0
      %1033 = vmatprep.subr.mxu0 0.0
      %1034 = vmatpush1.msra.mxu0 0.0
      %1035 = vmatprep.subr.mxu0 0.0
      %1036 = vmatpush1.msra.mxu0 0.0
      %1037 = vmatprep.subr.mxu0 0.0
      %1038 = vmatpush1.msra.mxu0 0.0
      %1039 = vmatprep.subr.mxu0 0.0
      %1040 = vmatpush1.msra.mxu0 0.0
      %1041 = vmatprep.subr.mxu0 0.0
      %1042 = vmatpush1.msra.mxu0 0.0
      %1043 = vmatprep.subr.mxu0 0.0
      %1044 = vmatpush1.msra.mxu0 0.0
      %1045 = vmatprep.subr.mxu0 0.0
      %1046 = vmatpush1.msra.mxu0 0.0
      %1047 = vmatprep.subr.mxu0 0.0
      %1048 = vmatpush1.msra.mxu0 0.0
      %1049 = vmatprep.subr.mxu0 0.0
      %1050 = vmatpush1.msra.mxu0 0.0
      %1051 = vmatprep.subr.mxu0 0.0
      %1052 = vmatpush1.msra.mxu0 0.0
      %1053 = vmatprep.subr.mxu0 0.0
      %1054 = vmatpush1.msra.mxu0 0.0
      %1055 = vmatprep.subr.mxu0 0.0
      %1056 = vmatpush1.msra.mxu0 0.0
      %1057 = vmatprep.subr.mxu0 0.0
      %1058 = vmatpush1.msra.mxu0 0.0
      %1059 = vmatprep.mubr.f32.mxu0 0.0
      %1060 = vmatmul.mubr.f32.gmra.mrb[0].mxu0 %v534
      %v1061 = vpop.f32.mrb[0].mxu0
      %v1062 = vadd.f32 0.0, %v1061
      %v1063 = vpop.f32.mrb[0].mxu0
      %v1064 = vadd.f32 0.0, %v1063
      %1065 = vdwg.mxu0
      %1066 = vmatprep.subr.mxu0 %v353
      %1067 = vmatpush1.msra.mxu0 %v352
      %1068 = vmatprep.subr.mxu0 %v357
      %1069 = vmatpush1.msra.mxu0 %v356
      %1070 = vmatprep.subr.mxu0 %v361
      %1071 = vmatpush1.msra.mxu0 %v360
      %1072 = vmatprep.subr.mxu0 %v365
      %1073 = vmatpush1.msra.mxu0 %v364
      %1074 = vmatprep.subr.mxu0 %v369
      %1075 = vmatpush1.msra.mxu0 %v368
      %1076 = vmatprep.subr.mxu0 %v373
      %1077 = vmatpush1.msra.mxu0 %v372
      %1078 = vmatprep.subr.mxu0 %v377
      %1079 = vmatpush1.msra.mxu0 %v376
      %1080 = vmatprep.subr.mxu0 %v381
      %1081 = vmatpush1.msra.mxu0 %v380
      %1082 = vmatprep.subr.mxu0 %v385
      %1083 = vmatpush1.msra.mxu0 %v384
      %1084 = vmatprep.subr.mxu0 %v389
      %1085 = vmatpush1.msra.mxu0 %v388
      %1086 = vmatprep.subr.mxu0 %v393
      %1087 = vmatpush1.msra.mxu0 %v392
      %1088 = vmatprep.subr.mxu0 %v397
      %1089 = vmatpush1.msra.mxu0 %v396
      %1090 = vmatprep.subr.mxu0 %v401
      %1091 = vmatpush1.msra.mxu0 %v400
      %1092 = vmatprep.subr.mxu0 %v405
      %1093 = vmatpush1.msra.mxu0 %v404
      %1094 = vmatprep.subr.mxu0 %v409
      %1095 = vmatpush1.msra.mxu0 %v408
      %1096 = vmatprep.subr.mxu0 %v413
      %1097 = vmatpush1.msra.mxu0 %v412
      %1098 = vmatprep.subr.mxu0 0.0
      %1099 = vmatpush1.msra.mxu0 0.0
      %1100 = vmatprep.subr.mxu0 0.0
      %1101 = vmatpush1.msra.mxu0 0.0
      %1102 = vmatprep.subr.mxu0 0.0
      %1103 = vmatpush1.msra.mxu0 0.0
      %1104 = vmatprep.subr.mxu0 0.0
      %1105 = vmatpush1.msra.mxu0 0.0
      %1106 = vmatprep.subr.mxu0 0.0
      %1107 = vmatpush1.msra.mxu0 0.0
      %1108 = vmatprep.subr.mxu0 0.0
      %1109 = vmatpush1.msra.mxu0 0.0
      %1110 = vmatprep.subr.mxu0 0.0
      %1111 = vmatpush1.msra.mxu0 0.0
      %1112 = vmatprep.subr.mxu0 0.0
      %1113 = vmatpush1.msra.mxu0 0.0
      %1114 = vmatprep.subr.mxu0 0.0
      %1115 = vmatpush1.msra.mxu0 0.0
      %1116 = vmatprep.subr.mxu0 0.0
      %1117 = vmatpush1.msra.mxu0 0.0
      %1118 = vmatprep.subr.mxu0 0.0
      %1119 = vmatpush1.msra.mxu0 0.0
      %1120 = vmatprep.subr.mxu0 0.0
      %1121 = vmatpush1.msra.mxu0 0.0
      %1122 = vmatprep.subr.mxu0 0.0
      %1123 = vmatpush1.msra.mxu0 0.0
      %1124 = vmatprep.subr.mxu0 0.0
      %1125 = vmatpush1.msra.mxu0 0.0
      %1126 = vmatprep.subr.mxu0 0.0
      %1127 = vmatpush1.msra.mxu0 0.0
      %1128 = vmatprep.subr.mxu0 0.0
      %1129 = vmatpush1.msra.mxu0 0.0
      %1130 = vmatprep.mubr.f32.mxu0 0.0
      %1131 = vmatmul.mubr.f32.gmra.mrb[0].mxu0 %v534
      %v1132 = vpop.f32.mrb[0].mxu0
      %v1133 = vadd.f32 0.0, %v1132
      %v1134 = vpop.f32.mrb[0].mxu0
      %v1135 = vadd.f32 0.0, %v1134
      %1136 = vdwg.mxu0
      %1137 = vmatprep.subr.mxu0 %v222
      %1138 = vmatpush1.msra.mxu0 %v221
      %1139 = vmatprep.subr.mxu0 %v226
      %1140 = vmatpush1.msra.mxu0 %v225
      %1141 = vmatprep.subr.mxu0 %v230
      %1142 = vmatpush1.msra.mxu0 %v229
      %1143 = vmatprep.subr.mxu0 %v234
      %1144 = vmatpush1.msra.mxu0 %v233
      %1145 = vmatprep.subr.mxu0 %v238
      %1146 = vmatpush1.msra.mxu0 %v237
      %1147 = vmatprep.subr.mxu0 %v242
      %1148 = vmatpush1.msra.mxu0 %v241
      %1149 = vmatprep.subr.mxu0 %v246
      %1150 = vmatpush1.msra.mxu0 %v245
      %1151 = vmatprep.subr.mxu0 %v250
      %1152 = vmatpush1.msra.mxu0 %v249
      %1153 = vmatprep.subr.mxu0 %v254
      %1154 = vmatpush1.msra.mxu0 %v253
      %1155 = vmatprep.subr.mxu0 %v258
      %1156 = vmatpush1.msra.mxu0 %v257
      %1157 = vmatprep.subr.mxu0 %v262
      %1158 = vmatpush1.msra.mxu0 %v261
      %1159 = vmatprep.subr.mxu0 %v266
      %1160 = vmatpush1.msra.mxu0 %v265
      %1161 = vmatprep.subr.mxu0 %v270
      %1162 = vmatpush1.msra.mxu0 %v269
      %1163 = vmatprep.subr.mxu0 %v274
      %1164 = vmatpush1.msra.mxu0 %v273
      %1165 = vmatprep.subr.mxu0 %v278
      %1166 = vmatpush1.msra.mxu0 %v277
      %1167 = vmatprep.subr.mxu0 %v282
      %1168 = vmatpush1.msra.mxu0 %v281
      %1169 = vmatprep.subr.mxu0 0.0
      %1170 = vmatpush1.msra.mxu0 0.0
      %1171 = vmatprep.subr.mxu0 0.0
      %1172 = vmatpush1.msra.mxu0 0.0
      %1173 = vmatprep.subr.mxu0 0.0
      %1174 = vmatpush1.msra.mxu0 0.0
      %1175 = vmatprep.subr.mxu0 0.0
      %1176 = vmatpush1.msra.mxu0 0.0
      %1177 = vmatprep.subr.mxu0 0.0
      %1178 = vmatpush1.msra.mxu0 0.0
      %1179 = vmatprep.subr.mxu0 0.0
      %1180 = vmatpush1.msra.mxu0 0.0
      %1181 = vmatprep.subr.mxu0 0.0
      %1182 = vmatpush1.msra.mxu0 0.0
      %1183 = vmatprep.subr.mxu0 0.0
      %1184 = vmatpush1.msra.mxu0 0.0
      %1185 = vmatprep.subr.mxu0 0.0
      %1186 = vmatpush1.msra.mxu0 0.0
      %1187 = vmatprep.subr.mxu0 0.0
      %1188 = vmatpush1.msra.mxu0 0.0
      %1189 = vmatprep.subr.mxu0 0.0
      %1190 = vmatpush1.msra.mxu0 0.0
      %1191 = vmatprep.subr.mxu0 0.0
      %1192 = vmatpush1.msra.mxu0 0.0
      %1193 = vmatprep.subr.mxu0 0.0
      %1194 = vmatpush1.msra.mxu0 0.0
      %1195 = vmatprep.subr.mxu0 0.0
      %1196 = vmatpush1.msra.mxu0 0.0
      %1197 = vmatprep.subr.mxu0 0.0
      %1198 = vmatpush1.msra.mxu0 0.0
      %1199 = vmatprep.subr.mxu0 0.0
      %1200 = vmatpush1.msra.mxu0 0.0
      %1201 = vmatprep.mubr.f32.mxu0 0.0
      %1202 = vmatmul.mubr.f32.gmra.mrb[0].mxu0 %v994
      %v1203 = vpop.f32.mrb[0].mxu0
      %v1204 = vadd.f32 %v1062, %v1203
      %v1205 = vpop.f32.mrb[0].mxu0
      %v1206 = vadd.f32 %v1064, %v1205
      %1207 = vdwg.mxu0
      %1208 = vmatprep.subr.mxu0 %v224
      %1209 = vmatpush1.msra.mxu0 %v223
      %1210 = vmatprep.subr.mxu0 %v228
      %1211 = vmatpush1.msra.mxu0 %v227
      %1212 = vmatprep.subr.mxu0 %v232
      %1213 = vmatpush1.msra.mxu0 %v231
      %1214 = vmatprep.subr.mxu0 %v236
      %1215 = vmatpush1.msra.mxu0 %v235
      %1216 = vmatprep.subr.mxu0 %v240
      %1217 = vmatpush1.msra.mxu0 %v239
      %1218 = vmatprep.subr.mxu0 %v244
      %1219 = vmatpush1.msra.mxu0 %v243
      %1220 = vmatprep.subr.mxu0 %v248
      %1221 = vmatpush1.msra.mxu0 %v247
      %1222 = vmatprep.subr.mxu0 %v252
      %1223 = vmatpush1.msra.mxu0 %v251
      %1224 = vmatprep.subr.mxu0 %v256
      %1225 = vmatpush1.msra.mxu0 %v255
      %1226 = vmatprep.subr.mxu0 %v260
      %1227 = vmatpush1.msra.mxu0 %v259
      %1228 = vmatprep.subr.mxu0 %v264
      %1229 = vmatpush1.msra.mxu0 %v263
      %1230 = vmatprep.subr.mxu0 %v268
      %1231 = vmatpush1.msra.mxu0 %v267
      %1232 = vmatprep.subr.mxu0 %v272
      %1233 = vmatpush1.msra.mxu0 %v271
      %1234 = vmatprep.subr.mxu0 %v276
      %1235 = vmatpush1.msra.mxu0 %v275
      %1236 = vmatprep.subr.mxu0 %v280
      %1237 = vmatpush1.msra.mxu0 %v279
      %1238 = vmatprep.subr.mxu0 %v284
      %1239 = vmatpush1.msra.mxu0 %v283
      %1240 = vmatprep.subr.mxu0 0.0
      %1241 = vmatpush1.msra.mxu0 0.0
      %1242 = vmatprep.subr.mxu0 0.0
      %1243 = vmatpush1.msra.mxu0 0.0
      %1244 = vmatprep.subr.mxu0 0.0
      %1245 = vmatpush1.msra.mxu0 0.0
      %1246 = vmatprep.subr.mxu0 0.0
      %1247 = vmatpush1.msra.mxu0 0.0
      %1248 = vmatprep.subr.mxu0 0.0
      %1249 = vmatpush1.msra.mxu0 0.0
      %1250 = vmatprep.subr.mxu0 0.0
      %1251 = vmatpush1.msra.mxu0 0.0
      %1252 = vmatprep.subr.mxu0 0.0
      %1253 = vmatpush1.msra.mxu0 0.0
      %1254 = vmatprep.subr.mxu0 0.0
      %1255 = vmatpush1.msra.mxu0 0.0
      %1256 = vmatprep.subr.mxu0 0.0
      %1257 = vmatpush1.msra.mxu0 0.0
      %1258 = vmatprep.subr.mxu0 0.0
      %1259 = vmatpush1.msra.mxu0 0.0
      %1260 = vmatprep.subr.mxu0 0.0
      %1261 = vmatpush1.msra.mxu0 0.0
      %1262 = vmatprep.subr.mxu0 0.0
      %1263 = vmatpush1.msra.mxu0 0.0
      %1264 = vmatprep.subr.mxu0 0.0
      %1265 = vmatpush1.msra.mxu0 0.0
      %1266 = vmatprep.subr.mxu0 0.0
      %1267 = vmatpush1.msra.mxu0 0.0
      %1268 = vmatprep.subr.mxu0 0.0
      %1269 = vmatpush1.msra.mxu0 0.0
      %1270 = vmatprep.subr.mxu0 0.0
      %1271 = vmatpush1.msra.mxu0 0.0
      %1272 = vmatprep.mubr.f32.mxu0 0.0
      %1273 = vmatmul.mubr.f32.gmra.mrb[0].mxu0 %v994
      %v1274 = vpop.f32.mrb[0].mxu0
      %v1275 = vadd.f32 %v1133, %v1274
      %v1276 = vpop.f32.mrb[0].mxu0
      %v1277 = vadd.f32 %v1135, %v1276
      %1278 = vdwg.mxu0
      %v1279 = vadd.f32 %v1204, %v506
      %v1280 = vadd.f32 %v1206, %v510
      %v1281 = vadd.f32 %v1275, %v514
      %v1282 = vadd.f32 %v1277, %v518
      %v1283 = vxor.u32 %v1279, 2147483648
      %v1284 = vmul.f32 %v1283, 1.442695
      %v1285 = vpow.pop %v1284
      %v1286 = vadd.f32 %v1285, 1.0
      %v1287 = vrcp.pop %v1286
      %v1288 = vmul.f32 1.0, %v1287
      %v1289 = vxor.u32 %v1280, 2147483648
      %v1290 = vmul.f32 %v1289, 1.442695
      %v1291 = vpow.pop %v1290
      %v1292 = vadd.f32 %v1291, 1.0
      %v1293 = vrcp.pop %v1292
      %v1294 = vmul.f32 1.0, %v1293
      %v1295 = vtanh.pop %v1281
      %v1296 = vxor.u32 %v1282, 2147483648
      %v1297 = vmul.f32 %v1296, 1.442695
      %v1298 = vpow.pop %v1297
      %v1299 = vadd.f32 %v1298, 1.0
      %v1300 = vrcp.pop %v1299
      %v1301 = vmul.f32 1.0, %v1300
      %v1302 = vmul.f32 %v1294, %v536
      %v1303 = vmul.f32 %v1288, %v1295
      %v1304 = vadd.f32 %v1302, %v1303
      %v1305 = vtanh.pop %v1304
      %v1306 = vmul.f32 %v1301, %v1305
      %1307 = vmatprep.subr.mxu0 0.0
      %1308 = vmatpush1.msra.mxu0 %v132
      %1309 = vmatprep.subr.mxu0 0.0
      %1310 = vmatpush1.msra.mxu0 %v133
      %1311 = vmatprep.subr.mxu0 0.0
      %1312 = vmatpush1.msra.mxu0 %v134
      %1313 = vmatprep.subr.mxu0 0.0
      %1314 = vmatpush1.msra.mxu0 %v135
      %1315 = vmatprep.subr.mxu0 0.0
      %1316 = vmatpush1.msra.mxu0 %v136
      %1317 = vmatprep.subr.mxu0 0.0
      %1318 = vmatpush1.msra.mxu0 %v137
      %1319 = vmatprep.subr.mxu0 0.0
      %1320 = vmatpush1.msra.mxu0 %v138
      %1321 = vmatprep.subr.mxu0 0.0
      %1322 = vmatpush1.msra.mxu0 %v139
      %1323 = vmatprep.subr.mxu0 0.0
      %1324 = vmatpush1.msra.mxu0 %v140
      %1325 = vmatprep.subr.mxu0 0.0
      %1326 = vmatpush1.msra.mxu0 %v141
      %1327 = vmatprep.subr.mxu0 0.0
      %1328 = vmatpush1.msra.mxu0 %v142
      %1329 = vmatprep.subr.mxu0 0.0
      %1330 = vmatpush1.msra.mxu0 %v143
      %1331 = vmatprep.subr.mxu0 0.0
      %1332 = vmatpush1.msra.mxu0 %v144
      %1333 = vmatprep.subr.mxu0 0.0
      %1334 = vmatpush1.msra.mxu0 %v145
      %1335 = vmatprep.subr.mxu0 0.0
      %1336 = vmatpush1.msra.mxu0 %v146
      %1337 = vmatprep.subr.mxu0 0.0
      %1338 = vmatpush1.msra.mxu0 %v147
      %1339 = vmatprep.subr.mxu0 0.0
      %1340 = vmatpush1.msra.mxu0 0.0
      %1341 = vmatprep.subr.mxu0 0.0
      %1342 = vmatpush1.msra.mxu0 0.0
      %1343 = vmatprep.subr.mxu0 0.0
      %1344 = vmatpush1.msra.mxu0 0.0
      %1345 = vmatprep.subr.mxu0 0.0
      %1346 = vmatpush1.msra.mxu0 0.0
      %1347 = vmatprep.subr.mxu0 0.0
      %1348 = vmatpush1.msra.mxu0 0.0
      %1349 = vmatprep.subr.mxu0 0.0
      %1350 = vmatpush1.msra.mxu0 0.0
      %1351 = vmatprep.subr.mxu0 0.0
      %1352 = vmatpush1.msra.mxu0 0.0
      %1353 = vmatprep.subr.mxu0 0.0
      %1354 = vmatpush1.msra.mxu0 0.0
      %1355 = vmatprep.subr.mxu0 0.0
      %1356 = vmatpush1.msra.mxu0 0.0
      %1357 = vmatprep.subr.mxu0 0.0
      %1358 = vmatpush1.msra.mxu0 0.0
      %1359 = vmatprep.subr.mxu0 0.0
      %1360 = vmatpush1.msra.mxu0 0.0
      %1361 = vmatprep.subr.mxu0 0.0
      %1362 = vmatpush1.msra.mxu0 0.0
      %1363 = vmatprep.subr.mxu0 0.0
      %1364 = vmatpush1.msra.mxu0 0.0
      %1365 = vmatprep.subr.mxu0 0.0
      %1366 = vmatpush1.msra.mxu0 0.0
      %1367 = vmatprep.subr.mxu0 0.0
      %1368 = vmatpush1.msra.mxu0 0.0
      %1369 = vmatprep.subr.mxu0 0.0
      %1370 = vmatpush1.msra.mxu0 0.0
      %1371 = vmatprep.mubr.f32.mxu0 0.0
      %1372 = vmatmul.mubr.f32.gmra.mrb[0].mxu0 %v1306
      %v1373 = vpop.f32.mrb[0].mxu0
      %v1374 = vadd.f32 0.0, %v1373
      %v1375 = vpop.f32.mrb[0].mxu0
      %1376 = vdwg.mxu0
      %v1377 = vsel %vm155, %v1374, -1e+30
      %1378 = vmax.xlane.f32.xlu0 %v1377
      %v1379 = vpop.xlane.xlu0 %1378
      %v1380 = vsub.f32 %v1377, %v1379
      %v1381 = vmul.f32 %v1380, 1.442695
      %v1382 = vpow.pop %v1381
      %v1383 = vsel %vm155, %v1382, 0.0
      %1384 = vadd.xlane.f32.xlu0 %v1383
      %v1385 = vpop.xlane.xlu0 %1384
      %v1386 = vmax.f32 %v1385, 1e-30
      %v1387 = vrcp.pop %v1386
      %v1388 = vmul.f32 %v1383, %v1387
      %1389 = vmatprep.subr.mxu0 0.0
      %1390 = vmatpush1.msra.mxu0 %v116
      %1391 = vmatprep.subr.mxu0 0.0
      %1392 = vmatpush1.msra.mxu0 %v117
      %1393 = vmatprep.subr.mxu0 0.0
      %1394 = vmatpush1.msra.mxu0 %v118
      %1395 = vmatprep.subr.mxu0 0.0
      %1396 = vmatpush1.msra.mxu0 %v119
      %1397 = vmatprep.subr.mxu0 0.0
      %1398 = vmatpush1.msra.mxu0 %v120
      %1399 = vmatprep.subr.mxu0 0.0
      %1400 = vmatpush1.msra.mxu0 %v121
      %1401 = vmatprep.subr.mxu0 0.0
      %1402 = vmatpush1.msra.mxu0 %v122
      %1403 = vmatprep.subr.mxu0 0.0
      %1404 = vmatpush1.msra.mxu0 %v123
      %1405 = vmatprep.subr.mxu0 0.0
      %1406 = vmatpush1.msra.mxu0 %v124
      %1407 = vmatprep.subr.mxu0 0.0
      %1408 = vmatpush1.msra.mxu0 %v125
      %1409 = vmatprep.subr.mxu0 0.0
      %1410 = vmatpush1.msra.mxu0 %v126
      %1411 = vmatprep.subr.mxu0 0.0
      %1412 = vmatpush1.msra.mxu0 %v127
      %1413 = vmatprep.subr.mxu0 0.0
      %1414 = vmatpush1.msra.mxu0 %v128
      %1415 = vmatprep.subr.mxu0 0.0
      %1416 = vmatpush1.msra.mxu0 %v129
      %1417 = vmatprep.subr.mxu0 0.0
      %1418 = vmatpush1.msra.mxu0 %v130
      %1419 = vmatprep.subr.mxu0 0.0
      %1420 = vmatpush1.msra.mxu0 %v131
      %1421 = vmatprep.subr.mxu0 0.0
      %1422 = vmatpush1.msra.mxu0 0.0
      %1423 = vmatprep.subr.mxu0 0.0
      %1424 = vmatpush1.msra.mxu0 0.0
      %1425 = vmatprep.subr.mxu0 0.0
      %1426 = vmatpush1.msra.mxu0 0.0
      %1427 = vmatprep.subr.mxu0 0.0
      %1428 = vmatpush1.msra.mxu0 0.0
      %1429 = vmatprep.subr.mxu0 0.0
      %1430 = vmatpush1.msra.mxu0 0.0
      %1431 = vmatprep.subr.mxu0 0.0
      %1432 = vmatpush1.msra.mxu0 0.0
      %1433 = vmatprep.subr.mxu0 0.0
      %1434 = vmatpush1.msra.mxu0 0.0
      %1435 = vmatprep.subr.mxu0 0.0
      %1436 = vmatpush1.msra.mxu0 0.0
      %1437 = vmatprep.subr.mxu0 0.0
      %1438 = vmatpush1.msra.mxu0 0.0
      %1439 = vmatprep.subr.mxu0 0.0
      %1440 = vmatpush1.msra.mxu0 0.0
      %1441 = vmatprep.subr.mxu0 0.0
      %1442 = vmatpush1.msra.mxu0 0.0
      %1443 = vmatprep.subr.mxu0 0.0
      %1444 = vmatpush1.msra.mxu0 0.0
      %1445 = vmatprep.subr.mxu0 0.0
      %1446 = vmatpush1.msra.mxu0 0.0
      %1447 = vmatprep.subr.mxu0 0.0
      %1448 = vmatpush1.msra.mxu0 0.0
      %1449 = vmatprep.subr.mxu0 0.0
      %1450 = vmatpush1.msra.mxu0 0.0
      %1451 = vmatprep.subr.mxu0 0.0
      %1452 = vmatpush1.msra.mxu0 0.0
      %1453 = vmatprep.mubr.f32.mxu0 0.0
      %1454 = vmatmul.mubr.f32.gmra.mrb[0].mxu0 %v1388
      %v1455 = vpop.f32.mrb[0].mxu0
      %v1456 = vadd.f32 0.0, %v1455
      %v1457 = vpop.f32.mrb[0].mxu0
      %1458 = vdwg.mxu0
    $region66: #{tpu_custom_call.1} parent=1 // loop_footer
      %s530 = sadd.s32 1, %s526
    $region67: #{tpu_custom_call.1} parent=1 // loop_footer_branch
      %525 = sbr.rel target = $region63
    $region68: #{tpu_custom_call.1} parent=1 // loop_exit
      _
    %1459 = vst [vmem:[#allocation13] sm:$0xff] %v531
    %1460 = vst [vmem:[#allocation14] sm:$0xff] %v532
    // Predicated region
    $region69: #{tpu_custom_call.1} parent=1 // pred_check
      _
    $region70: #{tpu_custom_call.1} parent=1 // pred_check_branch
      %1462 = sbr.rel (0) target = $region72
    $region71: #{tpu_custom_call.1} parent=1 // pred_region
      %s1464 = ssub.s32 128, 128
      %1465 = vsyncadd [#allocation4], %s1464
      %s1467 = sshll.u32 [#allocation13], 4
      %s1468 = int_to_ptr.vmem [resolvable:$true] %s1467
      %1470 = dma.vmem_to_hbm [thread:$0]  %s1468, 128, %s9, [#allocation4]
    $region72: #{tpu_custom_call.1} parent=1 // pred_fallthru
      _
    // Predicated region
    $region73: #{tpu_custom_call.1} parent=1 // pred_check
      _
    $region74: #{tpu_custom_call.1} parent=1 // pred_check_branch
      %1472 = sbr.rel (0) target = $region76
    $region75: #{tpu_custom_call.1} parent=1 // pred_region
      %s1474 = ssub.s32 128, 128
      %1475 = vsyncadd [#allocation15], %s1474
      %s1477 = sshll.u32 [#allocation14], 4
      %s1478 = int_to_ptr.vmem [resolvable:$true] %s1477
      %1480 = dma.vmem_to_hbm [thread:$0]  %s1478, 128, %s10, [#allocation15]
    $region76: #{tpu_custom_call.1} parent=1 // pred_fallthru
      _
    // Predicated region
    $region77: #{tpu_custom_call.1} parent=1 // pred_check
      _
    $region78: #{tpu_custom_call.1} parent=1 // pred_check_branch
      %1482 = sbr.rel (0) target = $region80
    $region79: #{tpu_custom_call.1} parent=1 // pred_region
      %1483 = dma.done [#allocation4], 128
    $region80: #{tpu_custom_call.1} parent=1 // pred_fallthru
      _
    // Predicated region
    $region81: #{tpu_custom_call.1} parent=1 // pred_check
      _
    $region82: #{tpu_custom_call.1} parent=1 // pred_check_branch
      %1485 = sbr.rel (0) target = $region84
    $region83: #{tpu_custom_call.1} parent=1 // pred_region
      %1486 = dma.done [#allocation15], 128
    $region84: #{tpu_custom_call.1} parent=1 // pred_fallthru
      _
    %1487 = vsyncpa [#allocation3], 1
    %1488 = vsyncpa [#allocation6], 1
    %1489 = vsyncpa [#allocation9], 1
    %1490 = vsyncpa [#allocation12], 1
    %1491 = vsyncpa [#allocation4], 1
    %1492 = vsyncpa [#allocation15], 1

</llo_original>
